<compile_context>
chip_gen: v6e
topology: v6e:2x2x1
jax: 0.10.0
libtpu: 0.0.40
codegen_flags: <defaults>
</compile_context>

<pallas_src>
import functools

import jax
import jax.numpy as jnp
from jax.experimental import pallas as pl
from jax.experimental.pallas import tpu as pltpu


# ----------------------------------------------------------------------------
# Pallas kernels
# ----------------------------------------------------------------------------
def image_encoder_kernel(patches_ref, wconv_ref, bconv_ref, wfc_ref, bfc_ref,
                         out_ref, acc_ref, *, inv_hw):
    # patches: [TB, THW, Kp] bf16   wconv: [Kp, Fp] bf16   bconv: [1, Fp] f32
    # wfc:     [Fp, Dp]      bf16   bfc:   [1, Dp]  f32
    # out:     [TB, Dp]      f32    acc (scratch): [TB, Fp] f32
    s = pl.program_id(1)

    @pl.when(s == 0)
    def _():
        acc_ref[...] = jnp.zeros_like(acc_ref)

    tb, thw, kp = patches_ref.shape
    # Fold the batch tile into the matmul M dimension: one long MXU stream.
    p2d = patches_ref[...].reshape(tb * thw, kp)
    feat = jnp.dot(p2d, wconv_ref[...], preferred_element_type=jnp.float32)
    feat = jnp.maximum(feat + bconv_ref[...], 0.0)           # bias + ReLU
    # Reduce this spatial tile immediately into the [TB, Fp] accumulator.
    acc_ref[...] += feat.reshape(tb, thw, -1).sum(axis=1)

    @pl.when(s == pl.num_programs(1) - 1)
    def _():
        pooled = acc_ref[...] * inv_hw                       # global avg pool
        emb = jnp.dot(pooled.astype(wfc_ref.dtype), wfc_ref[...],
                      preferred_element_type=jnp.float32) + bfc_ref[...]
        # F.normalize(p=2, dim=1): x / max(||x||, 1e-12) == x*rsqrt(max(ss,eps^2))
        ssq = jnp.sum(emb * emb, axis=-1, keepdims=True)
        out_ref[...] = emb * jax.lax.rsqrt(jnp.maximum(ssq, 1e-24))


def text_encoder_kernel(tokemb_ref, mask_ref, wpool_ref, bpool_ref,
                        wfc_ref, bfc_ref, out_ref):
    # tokemb: [TB, S, Hp] bf16   mask: [TB, S, 1] f32
    # wpool:  [Hp, Hp] bf16      bpool: [1, Hp] f32
    # wfc:    [Hp, Dp] bf16      bfc:   [1, Dp] f32   out: [TB, Dp] f32
    emb = tokemb_ref[...].astype(jnp.float32)
    mask = mask_ref[...]
    # attention-mask weighted mean pooling over the sequence -> [TB, Hp] (f32)
    summed = jnp.sum(emb * mask, axis=1)
    counts = jnp.sum(mask, axis=1)
    pooled = summed / jnp.maximum(counts, 1e-9)
    # BERT-style pooler: tanh(dense(pooled)) -- tanh / adds kept in f32
    pooled = jnp.tanh(
        jnp.dot(pooled.astype(wpool_ref.dtype), wpool_ref[...],
                preferred_element_type=jnp.float32) + bpool_ref[...])
    # fc projection to embed_dim
    x = jnp.dot(pooled.astype(wfc_ref.dtype), wfc_ref[...],
                preferred_element_type=jnp.float32) + bfc_ref[...]
    # F.normalize(p=2, dim=1)
    ssq = jnp.sum(x * x, axis=-1, keepdims=True)
    out_ref[...] = x * jax.lax.rsqrt(jnp.maximum(ssq, 1e-24))


# ----------------------------------------------------------------------------
# Glue helpers
# ----------------------------------------------------------------------------
def _round_up(x, m):
    return ((x + m - 1) // m) * m


def _pad_to(x, shape):
    pads = [(0, t - s) for s, t in zip(x.shape, shape)]
    return jnp.pad(x, pads)


def _im2col_3x3(x_nhwc):
    """im2col for a 3x3 conv, stride 1, padding 1.  [B,H,W,C] -> [B,H*W,9*C]."""
    B, H, W, C = x_nhwc.shape
    xp = jnp.pad(x_nhwc, ((0, 0), (1, 1), (1, 1), (0, 0)))
    taps = [xp[:, dh:dh + H, dw:dw + W, :] for dh in range(3) for dw in range(3)]
    patches = jnp.stack(taps, axis=3)              # [B, H, W, 9, C]
    return patches.reshape(B, H * W, 9 * C)


# ----------------------------------------------------------------------------
# Wrappers
# ----------------------------------------------------------------------------
def image_encoder(images_nchw, params):
    # images: [B, C, H, W] (PyTorch layout) -> NHWC -> im2col (glue)
    x = jnp.transpose(images_nchw, (0, 2, 3, 1))
    patches = _im2col_3x3(x)                       # [B, HW, 9*C]
    B, HW, K = patches.shape
    F = params["img_wconv"].shape[-1]
    D = params["img_wfc"].shape[-1]
    Kp, Fp, Dp = _round_up(K, 128), _round_up(F, 128), _round_up(D, 128)

    # Zero-pad feature dims to lane width; bf16 matmul operands, f32 biases.
    patches = _pad_to(patches, (B, HW, Kp)).astype(jnp.bfloat16)
    wconv = _pad_to(params["img_wconv"], (Kp, Fp)).astype(jnp.bfloat16)
    bconv = _pad_to(params["img_bconv"], (1, Fp)).astype(jnp.float32)
    wfc = _pad_to(params["img_wfc"], (Fp, Dp)).astype(jnp.bfloat16)
    bfc = _pad_to(params["img_bfc"], (1, Dp)).astype(jnp.float32)

    TB = 8 if B % 8 == 0 else B                    # batch tile ("parallel")
    THW = 128 if HW % 128 == 0 else HW             # spatial tile ("arbitrary")

    flops = 2 * B * HW * Kp * Fp + 2 * B * Fp * Dp
    bytes_acc = (patches.size * 2 + (Kp * Fp + Fp * Dp) * 2
                 + (Fp + Dp) * 4 + B * Dp * 4)

    out = pl.pallas_call(
        functools.partial(image_encoder_kernel, inv_hw=1.0 / HW),
        out_shape=jax.ShapeDtypeStruct((B, Dp), jnp.float32),
        grid_spec=pltpu.PrefetchScalarGridSpec(
            num_scalar_prefetch=0,
            grid=(B // TB, HW // THW),
            in_specs=[
                pl.BlockSpec((TB, THW, Kp), lambda b, s: (b, s, 0)),
                pl.BlockSpec((Kp, Fp), lambda b, s: (0, 0)),
                pl.BlockSpec((1, Fp), lambda b, s: (0, 0)),
                pl.BlockSpec((Fp, Dp), lambda b, s: (0, 0)),
                pl.BlockSpec((1, Dp), lambda b, s: (0, 0)),
            ],
            out_specs=pl.BlockSpec((TB, Dp), lambda b, s: (b, 0)),
            scratch_shapes=[pltpu.VMEM((TB, Fp), jnp.float32)],
        ),
        compiler_params=pltpu.CompilerParams(
            dimension_semantics=("parallel", "arbitrary"),
            vmem_limit_bytes=32 * 1024 * 1024),
        cost_estimate=pl.CostEstimate(flops=flops, transcendentals=0,
                                      bytes_accessed=bytes_acc),
    )(patches, wconv, bconv, wfc, bfc)
    return out[:, :D]


def text_encoder(input_ids, attention_mask, params):
    # embedding lookup (gather) stays in glue
    tokemb = params["txt_embed"][input_ids]        # [B, S, H]
    B, S, H = tokemb.shape
    D = params["txt_wfc"].shape[-1]
    Hp, Dp = _round_up(H, 128), _round_up(D, 128)

    tokemb = _pad_to(tokemb, (B, S, Hp)).astype(jnp.bfloat16)
    mask = attention_mask.astype(jnp.float32)[:, :, None]   # [B, S, 1]
    wpool = _pad_to(params["txt_wpool"], (Hp, Hp)).astype(jnp.bfloat16)
    bpool = _pad_to(params["txt_bpool"], (1, Hp)).astype(jnp.float32)
    wfc = _pad_to(params["txt_wfc"], (Hp, Dp)).astype(jnp.bfloat16)
    bfc = _pad_to(params["txt_bfc"], (1, Dp)).astype(jnp.float32)

    TB = 8 if B % 8 == 0 else B

    flops = 2 * B * Hp * Hp + 2 * B * Hp * Dp + 3 * B * S * Hp
    bytes_acc = (tokemb.size * 2 + mask.size * 4
                 + (Hp * Hp + Hp * Dp) * 2 + (Hp + Dp) * 4 + B * Dp * 4)

    out = pl.pallas_call(
        text_encoder_kernel,
        out_shape=jax.ShapeDtypeStruct((B, Dp), jnp.float32),
        grid_spec=pltpu.PrefetchScalarGridSpec(
            num_scalar_prefetch=0,
            grid=(B // TB,),
            in_specs=[
                pl.BlockSpec((TB, S, Hp), lambda b: (b, 0, 0)),
                pl.BlockSpec((TB, S, 1), lambda b: (b, 0, 0)),
                pl.BlockSpec((Hp, Hp), lambda b: (0, 0)),
                pl.BlockSpec((1, Hp), lambda b: (0, 0)),
                pl.BlockSpec((Hp, Dp), lambda b: (0, 0)),
                pl.BlockSpec((1, Dp), lambda b: (0, 0)),
            ],
            out_specs=pl.BlockSpec((TB, Dp), lambda b: (b, 0)),
        ),
        compiler_params=pltpu.CompilerParams(
            dimension_semantics=("parallel",),
            vmem_limit_bytes=32 * 1024 * 1024),
        cost_estimate=pl.CostEstimate(flops=flops, transcendentals=B * Hp,
                                      bytes_accessed=bytes_acc),
    )(tokemb, mask, wpool, bpool, wfc, bfc)
    return out[:, :D]


@jax.jit
def dual_encoder_forward(images, input_ids, attention_mask, params):
    image_emb = image_encoder(images, params)
    text_emb = text_encoder(input_ids, attention_mask, params)
    return image_emb, text_emb


# ----------------------------------------------------------------------------
# Deterministic parameter init + example run
# ----------------------------------------------------------------------------
def init_params(key, *, C, F, HID, VOCAB, D):
    ks = jax.random.split(key, 8)
    s = 0.02
    return {
        # image tower (conv 3x3 C->F, head F->D)
        "img_wconv": s * jax.random.normal(ks[0], (9 * C, F), jnp.float32),
        "img_bconv": jnp.zeros((1, F), jnp.float32),
        "img_wfc":   s * jax.random.normal(ks[1], (F, D), jnp.float32),
        "img_bfc":   jnp.zeros((1, D), jnp.float32),
        # text tower (embedding, pooler HxH, fc H->D)
        "txt_embed": s * jax.random.normal(ks[2], (VOCAB, HID), jnp.float32),
        "txt_wpool": s * jax.random.normal(ks[3], (HID, HID), jnp.float32),
        "txt_bpool": jnp.zeros((1, HID), jnp.float32),
        "txt_wfc":   s * jax.random.normal(ks[4], (HID, D), jnp.float32),
        "txt_bfc":   jnp.zeros((1, D), jnp.float32),
    }


if __name__ == "__main__":
    B, C, H, W = 2, 4, 16, 16       # images
    S, VOCAB, HID = 8, 128, 32      # text seq / vocab / "bert" hidden size
    F, D = 16, 32                   # conv filters / embed_dim

    key = jax.random.PRNGKey(0)
    k_img, k_ids, k_par = jax.random.split(key, 3)

    images = jax.random.normal(k_img, (B, C, H, W), jnp.float32)
    input_ids = jax.random.randint(k_ids, (B, S), 0, VOCAB, dtype=jnp.int32)
    attention_mask = jnp.ones((B, S), jnp.int32).at[1, 5:].set(0)

    params = init_params(k_par, C=C, F=F, HID=HID, VOCAB=VOCAB, D=D)

    image_emb, text_emb = dual_encoder_forward(images, input_ids,
                                               attention_mask, params)
    jax.block_until_ready((image_emb, text_emb))

    assert image_emb.shape == (B, D) and text_emb.shape == (B, D)
    # both outputs must be L2-normalized along dim=1
    assert jnp.allclose(jnp.linalg.norm(image_emb, axis=1), 1.0, atol=1e-4)
    assert jnp.allclose(jnp.linalg.norm(text_emb, axis=1), 1.0, atol=1e-4)
    print("KERNEL_OK")
</pallas_src>

<mosaic_0001>
module attributes {stable_mosaic.version = 11 : i64} {
  func.func @image_encoder_kernel(%arg0: i32, %arg1: i32, %arg2: memref<2x128x128xbf16, #tpu.memory_space<vmem>>, %arg3: memref<128x128xbf16, #tpu.memory_space<vmem>>, %arg4: memref<1x128xf32, #tpu.memory_space<vmem>>, %arg5: memref<128x128xbf16, #tpu.memory_space<vmem>>, %arg6: memref<1x128xf32, #tpu.memory_space<vmem>>, %arg7: memref<2x128xf32, #tpu.memory_space<vmem>>, %arg8: memref<2x128xf32, #tpu.memory_space<vmem>>) attributes {dimension_semantics = [#tpu.dimension_semantics<parallel>, #tpu.dimension_semantics<arbitrary>], iteration_bounds = array<i64: 1, 2>, scalar_prefetch = 0 : i64, scratch_operands = 1 : i64, tpu.core_type = #tpu.core_type<tc>, window_params = [{transform_indices = @transform_0, window_bounds = array<i64: 2, 128, 128>}, {pipeline_mode = #tpu.pipeline_mode<synchronous>, transform_indices = @transform_1, window_bounds = array<i64: 128, 128>}, {pipeline_mode = #tpu.pipeline_mode<synchronous>, transform_indices = @transform_2, window_bounds = array<i64: 1, 128>}, {pipeline_mode = #tpu.pipeline_mode<synchronous>, transform_indices = @transform_3, window_bounds = array<i64: 128, 128>}, {pipeline_mode = #tpu.pipeline_mode<synchronous>, transform_indices = @transform_4, window_bounds = array<i64: 1, 128>}, {transform_indices = @transform_5, window_bounds = array<i64: 2, 128>}]} {
    %c0_i32 = arith.constant 0 : i32
    %0 = arith.cmpi eq, %arg1, %c0_i32 : i32
    %1 = arith.extui %0 : i1 to i32
    %c0_i32_0 = arith.constant 0 : i32
    %2 = arith.cmpi ne, %1, %c0_i32_0 : i32
    scf.if %2 {
      %cst_14 = arith.constant 0.000000e+00 : f32
      %20 = vector.broadcast %cst_14 : f32 to vector<2x128xf32>
      %c0_15 = arith.constant 0 : index
      %c0_16 = arith.constant 0 : index
      %21 = vector.load %arg8[%c0_15, %c0_16] : memref<2x128xf32, #tpu.memory_space<vmem>>, vector<2x128xf32>
      tpu.vector_store %arg8[%c0_15, %c0_16], %20 {strides = array<i32>} : memref<2x128xf32, #tpu.memory_space<vmem>>, vector<2x128xf32>,
    } else {
    }
    %c0 = arith.constant 0 : index
    %c0_1 = arith.constant 0 : index
    %c0_2 = arith.constant 0 : index
    %3 = vector.load %arg2[%c0, %c0_1, %c0_2] : memref<2x128x128xbf16, #tpu.memory_space<vmem>>, vector<2x128x128xbf16>
    %4 = vector.shape_cast %3 : vector<2x128x128xbf16> to vector<256x128xbf16>
    %c0_3 = arith.constant 0 : index
    %c0_4 = arith.constant 0 : index
    %5 = vector.load %arg3[%c0_3, %c0_4] : memref<128x128xbf16, #tpu.memory_space<vmem>>, vector<128x128xbf16>
    %cst = arith.constant dense<0.000000e+00> : vector<256x128xf32>
    %6 = tpu.matmul %4, %5, %cst {dimension_numbers = #tpu.dot_dimension_numbers<[1], [0], [0], [1], [0, 0, 1, 1], [], []>} : vector<256x128xbf16>, vector<128x128xbf16>, vector<256x128xf32> -> vector<256x128xf32>
    %c0_5 = arith.constant 0 : index
    %c0_6 = arith.constant 0 : index
    %7 = vector.load %arg4[%c0_5, %c0_6] : memref<1x128xf32, #tpu.memory_space<vmem>>, vector<1x128xf32>
    %8 = vector.broadcast %7 : vector<1x128xf32> to vector<256x128xf32>
    %9 = arith.addf %6, %8 : vector<256x128xf32>
    %cst_7 = arith.constant 0.000000e+00 : f32
    %10 = vector.broadcast %cst_7 : f32 to vector<256x128xf32>
    %11 = arith.maximumf %9, %10 : vector<256x128xf32>
    %c0_8 = arith.constant 0 : index
    %c0_9 = arith.constant 0 : index
    %12 = vector.load %arg8[%c0_8, %c0_9] : memref<2x128xf32, #tpu.memory_space<vmem>>, vector<2x128xf32>
    %13 = vector.shape_cast %11 : vector<256x128xf32> to vector<2x128x128xf32>
    %cst_10 = arith.constant dense<0.000000e+00> : vector<2x128xf32>
    %14 = vector.multi_reduction <add>, %13, %cst_10 [1] : vector<2x128x128xf32> to vector<2x128xf32>
    %15 = arith.addf %12, %14 : vector<2x128xf32>
    %c0_11 = arith.constant 0 : index
    %c0_12 = arith.constant 0 : index
    %16 = vector.load %arg8[%c0_11, %c0_12] : memref<2x128xf32, #tpu.memory_space<vmem>>, vector<2x128xf32>
    tpu.vector_store %arg8[%c0_11, %c0_12], %15 {strides = array<i32>} : memref<2x128xf32, #tpu.memory_space<vmem>>, vector<2x128xf32>,
    %c1_i32 = arith.constant 1 : i32
    %17 = arith.cmpi eq, %arg1, %c1_i32 : i32
    %18 = arith.extui %17 : i1 to i32
    %c0_i32_13 = arith.constant 0 : i32
    %19 = arith.cmpi ne, %18, %c0_i32_13 : i32
    scf.if %19 {
      %c0_14 = arith.constant 0 : index
      %c0_15 = arith.constant 0 : index
      %20 = vector.load %arg8[%c0_14, %c0_15] : memref<2x128xf32, #tpu.memory_space<vmem>>, vector<2x128xf32>
      %cst_16 = arith.constant 3.906250e-03 : f32
      %21 = vector.broadcast %cst_16 : f32 to vector<2x128xf32>
      %22 = arith.mulf %20, %21 : vector<2x128xf32>
      %23 = arith.truncf %22 : vector<2x128xf32> to vector<2x128xbf16>
      %c0_17 = arith.constant 0 : index
      %c0_18 = arith.constant 0 : index
      %24 = vector.load %arg5[%c0_17, %c0_18] : memref<128x128xbf16, #tpu.memory_space<vmem>>, vector<128x128xbf16>
      %cst_19 = arith.constant dense<0.000000e+00> : vector<2x128xf32>
      %25 = tpu.matmul %23, %24, %cst_19 {dimension_numbers = #tpu.dot_dimension_numbers<[1], [0], [0], [1], [0, 0, 1, 1], [], []>} : vector<2x128xbf16>, vector<128x128xbf16>, vector<2x128xf32> -> vector<2x128xf32>
      %c0_20 = arith.constant 0 : index
      %c0_21 = arith.constant 0 : index
      %26 = vector.load %arg6[%c0_20, %c0_21] : memref<1x128xf32, #tpu.memory_space<vmem>>, vector<1x128xf32>
      %27 = vector.broadcast %26 : vector<1x128xf32> to vector<2x128xf32>
      %28 = arith.addf %25, %27 : vector<2x128xf32>
      %29 = arith.mulf %28, %28 : vector<2x128xf32>
      %cst_22 = arith.constant dense<0.000000e+00> : vector<2xf32>
      %30 = vector.multi_reduction <add>, %29, %cst_22 [1] : vector<2x128xf32> to vector<2xf32>
      %31 = vector.shape_cast %30 : vector<2xf32> to vector<2x1xf32>
      %cst_23 = arith.constant 1.000000e-24 : f32
      %32 = vector.broadcast %cst_23 : f32 to vector<2x1xf32>
      %33 = arith.maximumf %31, %32 : vector<2x1xf32>
      %34 = math.rsqrt %33 : vector<2x1xf32>
      %35 = vector.broadcast %34 : vector<2x1xf32> to vector<2x128xf32>
      %36 = arith.mulf %28, %35 : vector<2x128xf32>
      %c0_24 = arith.constant 0 : index
      %c0_25 = arith.constant 0 : index
      %37 = vector.load %arg7[%c0_24, %c0_25] : memref<2x128xf32, #tpu.memory_space<vmem>>, vector<2x128xf32>
      tpu.vector_store %arg7[%c0_24, %c0_25], %36 {strides = array<i32>} : memref<2x128xf32, #tpu.memory_space<vmem>>, vector<2x128xf32>,
    } else {
    }
    return
  }
  func.func @transform_0(%arg0: i32, %arg1: i32) -> (i32, i32, i32) {
    %c0_i32 = arith.constant 0 : i32
    %c0_i32_0 = arith.constant 0 : i32
    return %arg0, %arg1, %c0_i32 : i32, i32, i32
  }
  func.func @transform_1(%arg0: i32, %arg1: i32) -> (i32, i32) {
    %c0_i32 = arith.constant 0 : i32
    %c0_i32_0 = arith.constant 0 : i32
    %c0_i32_1 = arith.constant 0 : i32
    return %c0_i32, %c0_i32_0 : i32, i32
  }
  func.func @transform_2(%arg0: i32, %arg1: i32) -> (i32, i32) {
    %c0_i32 = arith.constant 0 : i32
    %c0_i32_0 = arith.constant 0 : i32
    %c0_i32_1 = arith.constant 0 : i32
    return %c0_i32, %c0_i32_0 : i32, i32
  }
  func.func @transform_3(%arg0: i32, %arg1: i32) -> (i32, i32) {
    %c0_i32 = arith.constant 0 : i32
    %c0_i32_0 = arith.constant 0 : i32
    %c0_i32_1 = arith.constant 0 : i32
    return %c0_i32, %c0_i32_0 : i32, i32
  }
  func.func @transform_4(%arg0: i32, %arg1: i32) -> (i32, i32) {
    %c0_i32 = arith.constant 0 : i32
    %c0_i32_0 = arith.constant 0 : i32
    %c0_i32_1 = arith.constant 0 : i32
    return %c0_i32, %c0_i32_0 : i32, i32
  }
  func.func @transform_5(%arg0: i32, %arg1: i32) -> (i32, i32) {
    %c0_i32 = arith.constant 0 : i32
    %c0_i32_0 = arith.constant 0 : i32
    return %arg0, %c0_i32 : i32, i32
  }
}

module attributes {stable_mosaic.version = 11 : i64} {
  func.func @text_encoder_kernel(%arg0: i32, %arg1: memref<2x8x128xbf16, #tpu.memory_space<vmem>>, %arg2: memref<2x8x1xf32, #tpu.memory_space<vmem>>, %arg3: memref<128x128xbf16, #tpu.memory_space<vmem>>, %arg4: memref<1x128xf32, #tpu.memory_space<vmem>>, %arg5: memref<128x128xbf16, #tpu.memory_space<vmem>>, %arg6: memref<1x128xf32, #tpu.memory_space<vmem>>, %arg7: memref<2x128xf32, #tpu.memory_space<vmem>>) attributes {dimension_semantics = [#tpu.dimension_semantics<parallel>], iteration_bounds = array<i64: 1>, scalar_prefetch = 0 : i64, scratch_operands = 0 : i64, tpu.core_type = #tpu.core_type<tc>, window_params = [{transform_indices = @transform_0, window_bounds = array<i64: 2, 8, 128>}, {transform_indices = @transform_1, window_bounds = array<i64: 2, 8, 1>}, {pipeline_mode = #tpu.pipeline_mode<synchronous>, transform_indices = @transform_2, window_bounds = array<i64: 128, 128>}, {pipeline_mode = #tpu.pipeline_mode<synchronous>, transform_indices = @transform_3, window_bounds = array<i64: 1, 128>}, {pipeline_mode = #tpu.pipeline_mode<synchronous>, transform_indices = @transform_4, window_bounds = array<i64: 128, 128>}, {pipeline_mode = #tpu.pipeline_mode<synchronous>, transform_indices = @transform_5, window_bounds = array<i64: 1, 128>}, {transform_indices = @transform_6, window_bounds = array<i64: 2, 128>}]} {
    %c0 = arith.constant 0 : index
    %c0_0 = arith.constant 0 : index
    %c0_1 = arith.constant 0 : index
    %0 = vector.load %arg1[%c0, %c0_0, %c0_1] : memref<2x8x128xbf16, #tpu.memory_space<vmem>>, vector<2x8x128xbf16>
    %1 = arith.extf %0 : vector<2x8x128xbf16> to vector<2x8x128xf32>
    %c0_2 = arith.constant 0 : index
    %c0_3 = arith.constant 0 : index
    %c0_4 = arith.constant 0 : index
    %2 = vector.load %arg2[%c0_2, %c0_3, %c0_4] : memref<2x8x1xf32, #tpu.memory_space<vmem>>, vector<2x8x1xf32>
    %3 = vector.broadcast %2 : vector<2x8x1xf32> to vector<2x8x128xf32>
    %4 = arith.mulf %1, %3 : vector<2x8x128xf32>
    %cst = arith.constant dense<0.000000e+00> : vector<2x128xf32>
    %5 = vector.multi_reduction <add>, %4, %cst [1] : vector<2x8x128xf32> to vector<2x128xf32>
    %cst_5 = arith.constant dense<0.000000e+00> : vector<2x1xf32>
    %6 = vector.multi_reduction <add>, %2, %cst_5 [1] : vector<2x8x1xf32> to vector<2x1xf32>
    %cst_6 = arith.constant 9.99999971E-10 : f32
    %7 = vector.broadcast %cst_6 : f32 to vector<2x1xf32>
    %8 = arith.maximumf %6, %7 : vector<2x1xf32>
    %9 = vector.broadcast %8 : vector<2x1xf32> to vector<2x128xf32>
    %10 = arith.divf %5, %9 : vector<2x128xf32>
    %11 = arith.truncf %10 : vector<2x128xf32> to vector<2x128xbf16>
    %c0_7 = arith.constant 0 : index
    %c0_8 = arith.constant 0 : index
    %12 = vector.load %arg3[%c0_7, %c0_8] : memref<128x128xbf16, #tpu.memory_space<vmem>>, vector<128x128xbf16>
    %cst_9 = arith.constant dense<0.000000e+00> : vector<2x128xf32>
    %13 = tpu.matmul %11, %12, %cst_9 {dimension_numbers = #tpu.dot_dimension_numbers<[1], [0], [0], [1], [0, 0, 1, 1], [], []>} : vector<2x128xbf16>, vector<128x128xbf16>, vector<2x128xf32> -> vector<2x128xf32>
    %c0_10 = arith.constant 0 : index
    %c0_11 = arith.constant 0 : index
    %14 = vector.load %arg4[%c0_10, %c0_11] : memref<1x128xf32, #tpu.memory_space<vmem>>, vector<1x128xf32>
    %15 = vector.broadcast %14 : vector<1x128xf32> to vector<2x128xf32>
    %16 = arith.addf %13, %15 : vector<2x128xf32>
    %17 = math.tanh %16 : vector<2x128xf32>
    %18 = arith.truncf %17 : vector<2x128xf32> to vector<2x128xbf16>
    %c0_12 = arith.constant 0 : index
    %c0_13 = arith.constant 0 : index
    %19 = vector.load %arg5[%c0_12, %c0_13] : memref<128x128xbf16, #tpu.memory_space<vmem>>, vector<128x128xbf16>
    %cst_14 = arith.constant dense<0.000000e+00> : vector<2x128xf32>
    %20 = tpu.matmul %18, %19, %cst_14 {dimension_numbers = #tpu.dot_dimension_numbers<[1], [0], [0], [1], [0, 0, 1, 1], [], []>} : vector<2x128xbf16>, vector<128x128xbf16>, vector<2x128xf32> -> vector<2x128xf32>
    %c0_15 = arith.constant 0 : index
    %c0_16 = arith.constant 0 : index
    %21 = vector.load %arg6[%c0_15, %c0_16] : memref<1x128xf32, #tpu.memory_space<vmem>>, vector<1x128xf32>
    %22 = vector.broadcast %21 : vector<1x128xf32> to vector<2x128xf32>
    %23 = arith.addf %20, %22 : vector<2x128xf32>
    %24 = arith.mulf %23, %23 : vector<2x128xf32>
    %cst_17 = arith.constant dense<0.000000e+00> : vector<2xf32>
    %25 = vector.multi_reduction <add>, %24, %cst_17 [1] : vector<2x128xf32> to vector<2xf32>
    %26 = vector.shape_cast %25 : vector<2xf32> to vector<2x1xf32>
    %cst_18 = arith.constant 1.000000e-24 : f32
    %27 = vector.broadcast %cst_18 : f32 to vector<2x1xf32>
    %28 = arith.maximumf %26, %27 : vector<2x1xf32>
    %29 = math.rsqrt %28 : vector<2x1xf32>
    %30 = vector.broadcast %29 : vector<2x1xf32> to vector<2x128xf32>
    %31 = arith.mulf %23, %30 : vector<2x128xf32>
    %c0_19 = arith.constant 0 : index
    %c0_20 = arith.constant 0 : index
    %32 = vector.load %arg7[%c0_19, %c0_20] : memref<2x128xf32, #tpu.memory_space<vmem>>, vector<2x128xf32>
    tpu.vector_store %arg7[%c0_19, %c0_20], %31 {strides = array<i32>} : memref<2x128xf32, #tpu.memory_space<vmem>>, vector<2x128xf32>,
    return
  }
  func.func @transform_0(%arg0: i32) -> (i32, i32, i32) {
    %c0_i32 = arith.constant 0 : i32
    %c0_i32_0 = arith.constant 0 : i32
    %c0_i32_1 = arith.constant 0 : i32
    return %arg0, %c0_i32, %c0_i32_0 : i32, i32, i32
  }
  func.func @transform_1(%arg0: i32) -> (i32, i32, i32) {
    %c0_i32 = arith.constant 0 : i32
    %c0_i32_0 = arith.constant 0 : i32
    %c0_i32_1 = arith.constant 0 : i32
    return %arg0, %c0_i32, %c0_i32_0 : i32, i32, i32
  }
  func.func @transform_2(%arg0: i32) -> (i32, i32) {
    %c0_i32 = arith.constant 0 : i32
    %c0_i32_0 = arith.constant 0 : i32
    %c0_i32_1 = arith.constant 0 : i32
    return %c0_i32, %c0_i32_0 : i32, i32
  }
  func.func @transform_3(%arg0: i32) -> (i32, i32) {
    %c0_i32 = arith.constant 0 : i32
    %c0_i32_0 = arith.constant 0 : i32
    %c0_i32_1 = arith.constant 0 : i32
    return %c0_i32, %c0_i32_0 : i32, i32
  }
  func.func @transform_4(%arg0: i32) -> (i32, i32) {
    %c0_i32 = arith.constant 0 : i32
    %c0_i32_0 = arith.constant 0 : i32
    %c0_i32_1 = arith.constant 0 : i32
    return %c0_i32, %c0_i32_0 : i32, i32
  }
  func.func @transform_5(%arg0: i32) -> (i32, i32) {
    %c0_i32 = arith.constant 0 : i32
    %c0_i32_0 = arith.constant 0 : i32
    %c0_i32_1 = arith.constant 0 : i32
    return %c0_i32, %c0_i32_0 : i32, i32
  }
  func.func @transform_6(%arg0: i32) -> (i32, i32) {
    %c0_i32 = arith.constant 0 : i32
    %c0_i32_0 = arith.constant 0 : i32
    return %arg0, %c0_i32 : i32, i32
  }
}

</mosaic_0001>

<llo_original>
// kernel: dual_encoder_forward.3
$region0: #{dual_encoder_forward.3}
  #allocation0 [shape = 'u32[]', space=smem, size = 0x4, offset = 0x4, fixed_abs, tag = 'smem constant byte address 0x4 - core index']
  #allocation1 [shape = 'u32[144,128]{1,0:T(1,128)}', space=vmem, size = 0x12000, scoped, tag = 'internal scratch']
  %s0 = inlined_call_operand.vmem [shape: bf16[2,8,128], index: 0, kind: input, shape index: {}]
  %s1 = inlined_call_operand.vmem [shape: f32[2,8,1], index: 1, kind: input, shape index: {}]
  %s2 = inlined_call_operand.vmem [shape: bf16[128,128], index: 2, kind: input, shape index: {}]
  %s3 = inlined_call_operand.vmem [shape: f32[1,128], index: 3, kind: input, shape index: {}]
  %s4 = inlined_call_operand.vmem [shape: bf16[128,128], index: 4, kind: input, shape index: {}]
  %s5 = inlined_call_operand.vmem [shape: f32[1,128], index: 5, kind: input, shape index: {}]
  %s6 = inlined_call_operand.hbm [shape: f32[2,128], index: 6, kind: output, shape index: {}]
  %s7 = sld [smem:[#allocation0]]
  $region34: #{dual_encoder_forward.3} parent=0
    _
  %s9 = ssub.s32 1, %s7
  %s10 = scalar_select 0, %s9, %s7
  $region1: #{dual_encoder_forward.3} parent=0
    #allocation2 [shape = 'u8[1024]{0}', space=vmem, size = 0x400, scoped, tag = 'output window, operand 0, single buffered']
    #allocation3 [shape = 's32[1]{0}', space=sflag, size = 0x4, scoped, tag = 'scoped memory for dual_encoder_forward.3']
    %11 = vsyncpa [#allocation3], 0
    // Predicated region
    $region2: #{dual_encoder_forward.3} parent=1 // pred_check
      _
    $region3: #{dual_encoder_forward.3} parent=1 // pred_check_branch
      %13 = sbr.rel (0) target = $region5
    $region4: #{dual_encoder_forward.3} parent=1 // pred_region
      _
    $region5: #{dual_encoder_forward.3} parent=1 // pred_fallthru
      _
    // Predicated region
    $region6: #{dual_encoder_forward.3} parent=1 // pred_check
      _
    $region7: #{dual_encoder_forward.3} parent=1 // pred_check_branch
      %15 = sbr.rel (0) target = $region9
    $region8: #{dual_encoder_forward.3} parent=1 // pred_region
      _
    $region9: #{dual_encoder_forward.3} parent=1 // pred_fallthru
      _
    // Predicated region
    $region10: #{dual_encoder_forward.3} parent=1 // pred_check
      _
    $region11: #{dual_encoder_forward.3} parent=1 // pred_check_branch
      %17 = sbr.rel (0) target = $region13
    $region12: #{dual_encoder_forward.3} parent=1 // pred_region
      _
    $region13: #{dual_encoder_forward.3} parent=1 // pred_fallthru
      _
    // Predicated region
    $region14: #{dual_encoder_forward.3} parent=1 // pred_check
      _
    $region15: #{dual_encoder_forward.3} parent=1 // pred_check_branch
      %19 = sbr.rel (0) target = $region17
    $region16: #{dual_encoder_forward.3} parent=1 // pred_region
      _
    $region17: #{dual_encoder_forward.3} parent=1 // pred_fallthru
      _
    // Predicated region
    $region18: #{dual_encoder_forward.3} parent=1 // pred_check
      _
    $region19: #{dual_encoder_forward.3} parent=1 // pred_check_branch
      %21 = sbr.rel (0) target = $region21
    $region20: #{dual_encoder_forward.3} parent=1 // pred_region
      _
    $region21: #{dual_encoder_forward.3} parent=1 // pred_fallthru
      _
    // Predicated region
    $region22: #{dual_encoder_forward.3} parent=1 // pred_check
      _
    $region23: #{dual_encoder_forward.3} parent=1 // pred_check_branch
      %23 = sbr.rel (0) target = $region25
    $region24: #{dual_encoder_forward.3} parent=1 // pred_region
      _
    $region25: #{dual_encoder_forward.3} parent=1 // pred_fallthru
      _
    %v25 = vld [vmem:[%s0] sm:$0xf]
    %v26 = vld [vmem:[%s0 + $0x4] sm:$0xf]
    %v27 = vunpack.c.l.bf16 %v25
    %v28 = vunpack.c.l.bf16 %v26
    %v29 = vld [vmem:[%s1] sm:$0xff]
    %v30 = vld [vmem:[%s1 + $0x8] sm:$0xff]
    %32 = vset.pattern.permute.xlu0 0
    %33 = vperm.xlu0 %32, %v29
    %v34 = vpop.permute.xlu0 %33
    %37 = vset.pattern.permute.xlu0 0
    %38 = vperm.xlu0 %37, %v30
    %v39 = vpop.permute.xlu0 %38
    %v41 = vmul.f32 %v27, %v34
    %v42 = vmul.f32 %v28, %v39
    %v43 = vrot.slane %v41, 4
    %v44 = vadd.f32 %v41, %v43
    %v45 = vrot.slane %v44, 2
    %v46 = vadd.f32 %v44, %v45
    %v47 = vrot.slane %v46, 1
    %v48 = vadd.f32 %v46, %v47
    %v49 = vrot.slane %v42, 4
    %v50 = vadd.f32 %v42, %v49
    %v51 = vrot.slane %v50, 2
    %v52 = vadd.f32 %v50, %v51
    %v53 = vrot.slane %v52, 1
    %v54 = vadd.f32 %v52, %v53
    %vm55 = vcmask 7168
    %v56 = vsel %vm55, %v29, 0.0
    %v57 = vrot.slane %v56, 4
    %v58 = vadd.f32 %v56, %v57
    %v59 = vrot.slane %v58, 2
    %v60 = vadd.f32 %v58, %v59
    %v61 = vrot.slane %v60, 1
    %v62 = vadd.f32 %v60, %v61
    %v63 = vsel %vm55, %v30, 0.0
    %v64 = vrot.slane %v63, 4
    %v65 = vadd.f32 %v63, %v64
    %v66 = vrot.slane %v65, 2
    %v67 = vadd.f32 %v65, %v66
    %v68 = vrot.slane %v67, 1
    %v69 = vadd.f32 %v67, %v68
    %v70 = vmax.f32 %v62, 1e-09
    %v71 = vmax.f32 %v69, 1e-09
    %73 = vset.pattern.permute.xlu0 0
    %74 = vperm.xlu0 %73, %v70
    %v75 = vpop.permute.xlu0 %74
    %78 = vset.pattern.permute.xlu0 0
    %79 = vperm.xlu0 %78, %v71
    %v80 = vpop.permute.xlu0 %79
    %v82 = vrcp.pop %v75
    %v83 = vmul.f32 %v48, %v82
    %v84 = vrcp.pop %v80
    %v85 = vmul.f32 %v54, %v84
    %v86 = vpack.c.bf16 %v83, %v83
    %v87 = vpack.c.bf16 %v85, %v85
    %v88 = vld [vmem:[%s2] sm:$0xf]
    %v89 = vld [vmem:[%s2 + $0x4] sm:$0xf]
    %v90 = vld [vmem:[%s2 + $0x8] sm:$0xf]
    %v91 = vld [vmem:[%s2 + $0xc] sm:$0xf]
    %v92 = vld [vmem:[%s2 + $0x10] sm:$0xf]
    %v93 = vld [vmem:[%s2 + $0x14] sm:$0xf]
    %v94 = vld [vmem:[%s2 + $0x18] sm:$0xf]
    %v95 = vld [vmem:[%s2 + $0x1c] sm:$0xf]
    %v96 = vld [vmem:[%s2 + $0x20] sm:$0xf]
    %v97 = vld [vmem:[%s2 + $0x24] sm:$0xf]
    %v98 = vld [vmem:[%s2 + $0x28] sm:$0xf]
    %v99 = vld [vmem:[%s2 + $0x2c] sm:$0xf]
    %v100 = vld [vmem:[%s2 + $0x30] sm:$0xf]
    %v101 = vld [vmem:[%s2 + $0x34] sm:$0xf]
    %v102 = vld [vmem:[%s2 + $0x38] sm:$0xf]
    %v103 = vld [vmem:[%s2 + $0x3c] sm:$0xf]
    %v104 = vld [vmem:[%s3] sm:$0x1]
    %v106 = vlaneseq
    %v107 = vshrl.u32 %v106, 7
    %v108 = vsub.s32 0, %v107
    %v109 = vrot.slane %v104, %v108
    %v113 = vunpack.c.l.b16 %v86
    %v114 = vunpack.c.l.b16 %v87
    %vm115 = vcmask 1041409
    %v116 = vsel %vm115, %v114, %v113
    %v117 = vpack.c.b16 %v116, %v116
    %v135 = vunpack.c.l.b16 %v88
    %v136 = vunpack.c.l.b16 %v89
    %v137 = vunpack.c.l.b16 %v90
    %v138 = vunpack.c.l.b16 %v91
    %v139 = vunpack.c.l.b16 %v92
    %v140 = vunpack.c.l.b16 %v93
    %v141 = vunpack.c.l.b16 %v94
    %v142 = vunpack.c.l.b16 %v95
    %v143 = vunpack.c.l.b16 %v96
    %v144 = vunpack.c.l.b16 %v97
    %v145 = vunpack.c.l.b16 %v98
    %v146 = vunpack.c.l.b16 %v99
    %v147 = vunpack.c.l.b16 %v100
    %v148 = vunpack.c.l.b16 %v101
    %v149 = vunpack.c.l.b16 %v102
    %v150 = vunpack.c.l.b16 %v103
    %v151 = vpack.c.b16 %v136, %v135
    %v152 = vpack.c.b16 %v138, %v137
    %v153 = vpack.c.b16 %v140, %v139
    %v154 = vpack.c.b16 %v142, %v141
    %v155 = vpack.c.b16 %v144, %v143
    %v156 = vpack.c.b16 %v146, %v145
    %v157 = vpack.c.b16 %v148, %v147
    %v158 = vpack.c.b16 %v150, %v149
    %167 = vmatprep.subr.bf16.mxu0 0
    %168 = vmatpush1.bf16.msra.mxu0 %v158
    %169 = vmatprep.subr.bf16.mxu0 0
    %170 = vmatpush1.bf16.msra.mxu0 %v157
    %171 = vmatprep.subr.bf16.mxu0 0
    %172 = vmatpush1.bf16.msra.mxu0 %v156
    %173 = vmatprep.subr.bf16.mxu0 0
    %174 = vmatpush1.bf16.msra.mxu0 %v155
    %175 = vmatprep.subr.bf16.mxu0 0
    %176 = vmatpush1.bf16.msra.mxu0 %v154
    %177 = vmatprep.subr.bf16.mxu0 0
    %178 = vmatpush1.bf16.msra.mxu0 %v153
    %179 = vmatprep.subr.bf16.mxu0 0
    %180 = vmatpush1.bf16.msra.mxu0 %v152
    %181 = vmatprep.subr.bf16.mxu0 0
    %182 = vmatpush1.bf16.msra.mxu0 %v151
    %183 = vmatprep.subr.bf16.mxu0 0
    %184 = vmatpush2.bf16.msra.mxu0 0
    %185 = vmatprep.subr.bf16.mxu0 0
    %186 = vmatpush2.bf16.msra.mxu0 0
    %187 = vmatprep.subr.bf16.mxu0 0
    %188 = vmatpush2.bf16.msra.mxu0 0
    %189 = vmatprep.subr.bf16.mxu0 0
    %190 = vmatpush2.bf16.msra.mxu0 0
    %191 = vmatprep.subr.bf16.mxu0 0
    %192 = vmatpush2.bf16.msra.mxu0 0
    %193 = vmatprep.subr.bf16.mxu0 0
    %194 = vmatpush2.bf16.msra.mxu0 0
    %195 = vmatprep.subr.bf16.mxu0 0
    %196 = vmatpush2.bf16.msra.mxu0 0
    %197 = vmatprep.subr.bf16.mxu0 0
    %198 = vmatpush2.bf16.msra.mxu0 0
    %199 = vmatprep.mubr.bf16.mxu0 0
    %200 = vmatmul.mubr.bf16.gmra.mxu0 %v117
    %v201 = vpop.f32.mrf.mxu0
    %v202 = vadd.f32 %v109, %v201
    %v203 = vpop.f32.mrf.mxu0
    %v204 = vpop.f32.mrf.mxu0
    %v205 = vpop.f32.mrf.mxu0
    %206 = vdwg.mxu0
    %v207 = vtanh.pop %v202
    %v208 = vpack.c.bf16 %v207, %v207
    %v209 = vld [vmem:[%s4] sm:$0xf]
    %v210 = vld [vmem:[%s4 + $0x4] sm:$0xf]
    %v211 = vld [vmem:[%s4 + $0x8] sm:$0xf]
    %v212 = vld [vmem:[%s4 + $0xc] sm:$0xf]
    %v213 = vld [vmem:[%s4 + $0x10] sm:$0xf]
    %v214 = vld [vmem:[%s4 + $0x14] sm:$0xf]
    %v215 = vld [vmem:[%s4 + $0x18] sm:$0xf]
    %v216 = vld [vmem:[%s4 + $0x1c] sm:$0xf]
    %v217 = vld [vmem:[%s4 + $0x20] sm:$0xf]
    %v218 = vld [vmem:[%s4 + $0x24] sm:$0xf]
    %v219 = vld [vmem:[%s4 + $0x28] sm:$0xf]
    %v220 = vld [vmem:[%s4 + $0x2c] sm:$0xf]
    %v221 = vld [vmem:[%s4 + $0x30] sm:$0xf]
    %v222 = vld [vmem:[%s4 + $0x34] sm:$0xf]
    %v223 = vld [vmem:[%s4 + $0x38] sm:$0xf]
    %v224 = vld [vmem:[%s4 + $0x3c] sm:$0xf]
    %v225 = vld [vmem:[%s5] sm:$0x1]
    %v227 = vlaneseq
    %v228 = vshrl.u32 %v227, 7
    %v229 = vsub.s32 0, %v228
    %v230 = vrot.slane %v225, %v229
    %v248 = vunpack.c.l.b16 %v209
    %v249 = vunpack.c.l.b16 %v210
    %v250 = vunpack.c.l.b16 %v211
    %v251 = vunpack.c.l.b16 %v212
    %v252 = vunpack.c.l.b16 %v213
    %v253 = vunpack.c.l.b16 %v214
    %v254 = vunpack.c.l.b16 %v215
    %v255 = vunpack.c.l.b16 %v216
    %v256 = vunpack.c.l.b16 %v217
    %v257 = vunpack.c.l.b16 %v218
    %v258 = vunpack.c.l.b16 %v219
    %v259 = vunpack.c.l.b16 %v220
    %v260 = vunpack.c.l.b16 %v221
    %v261 = vunpack.c.l.b16 %v222
    %v262 = vunpack.c.l.b16 %v223
    %v263 = vunpack.c.l.b16 %v224
    %v264 = vpack.c.b16 %v249, %v248
    %v265 = vpack.c.b16 %v251, %v250
    %v266 = vpack.c.b16 %v253, %v252
    %v267 = vpack.c.b16 %v255, %v254
    %v268 = vpack.c.b16 %v257, %v256
    %v269 = vpack.c.b16 %v259, %v258
    %v270 = vpack.c.b16 %v261, %v260
    %v271 = vpack.c.b16 %v263, %v262
    %280 = vmatprep.subr.bf16.mxu0 0
    %281 = vmatpush1.bf16.msra.mxu0 %v271
    %282 = vmatprep.subr.bf16.mxu0 0
    %283 = vmatpush1.bf16.msra.mxu0 %v270
    %284 = vmatprep.subr.bf16.mxu0 0
    %285 = vmatpush1.bf16.msra.mxu0 %v269
    %286 = vmatprep.subr.bf16.mxu0 0
    %287 = vmatpush1.bf16.msra.mxu0 %v268
    %288 = vmatprep.subr.bf16.mxu0 0
    %289 = vmatpush1.bf16.msra.mxu0 %v267
    %290 = vmatprep.subr.bf16.mxu0 0
    %291 = vmatpush1.bf16.msra.mxu0 %v266
    %292 = vmatprep.subr.bf16.mxu0 0
    %293 = vmatpush1.bf16.msra.mxu0 %v265
    %294 = vmatprep.subr.bf16.mxu0 0
    %295 = vmatpush1.bf16.msra.mxu0 %v264
    %296 = vmatprep.subr.bf16.mxu0 0
    %297 = vmatpush2.bf16.msra.mxu0 0
    %298 = vmatprep.subr.bf16.mxu0 0
    %299 = vmatpush2.bf16.msra.mxu0 0
    %300 = vmatprep.subr.bf16.mxu0 0
    %301 = vmatpush2.bf16.msra.mxu0 0
    %302 = vmatprep.subr.bf16.mxu0 0
    %303 = vmatpush2.bf16.msra.mxu0 0
    %304 = vmatprep.subr.bf16.mxu0 0
    %305 = vmatpush2.bf16.msra.mxu0 0
    %306 = vmatprep.subr.bf16.mxu0 0
    %307 = vmatpush2.bf16.msra.mxu0 0
    %308 = vmatprep.subr.bf16.mxu0 0
    %309 = vmatpush2.bf16.msra.mxu0 0
    %310 = vmatprep.subr.bf16.mxu0 0
    %311 = vmatpush2.bf16.msra.mxu0 0
    %312 = vmatprep.mubr.bf16.mxu0 0
    %313 = vmatmul.mubr.bf16.gmra.mxu0 %v208
    %v314 = vpop.f32.mrf.mxu0
    %v315 = vadd.f32 %v230, %v314
    %v316 = vpop.f32.mrf.mxu0
    %v317 = vpop.f32.mrf.mxu0
    %v318 = vpop.f32.mrf.mxu0
    %319 = vdwg.mxu0
    %v320 = vmul.f32 %v315, %v315
    %vm321 = vcmask 1041408
    %v322 = vsel %vm321, %v320, 0.0
    %323 = vadd.xlane.f32.xlu0 %v322
    %v324 = vpop.xlane.xlu0 %323
    %v325 = vmax.f32 %v324, 1e-24
    %v326 = vrsqrt.pop %v325
    %v327 = vmul.f32 %v315, %v326
    %328 = vst [vmem:[#allocation2] sm:$0x3] %v327
    // Predicated region
    $region26: #{dual_encoder_forward.3} parent=1 // pred_check
      _
    $region27: #{dual_encoder_forward.3} parent=1 // pred_check_branch
      %330 = sbr.rel (0) target = $region29
    $region28: #{dual_encoder_forward.3} parent=1 // pred_region
      %s332 = ssub.s32 32, 32
      %333 = vsyncadd [#allocation3], %s332
      %s335 = sshll.u32 [#allocation2], 4
      %s336 = int_to_ptr.vmem [resolvable:$true] %s335
      %338 = dma.vmem_to_hbm [thread:$0]  %s336, 32, %s6, [#allocation3]
    $region29: #{dual_encoder_forward.3} parent=1 // pred_fallthru
      _
    // Predicated region
    $region30: #{dual_encoder_forward.3} parent=1 // pred_check
      _
    $region31: #{dual_encoder_forward.3} parent=1 // pred_check_branch
      %340 = sbr.rel (0) target = $region33
    $region32: #{dual_encoder_forward.3} parent=1 // pred_region
      %341 = dma.done [#allocation3], 32
    $region33: #{dual_encoder_forward.3} parent=1 // pred_fallthru
      _
    %342 = vsyncpa [#allocation3], 1

// kernel: dual_encoder_forward.2
$region0: #{dual_encoder_forward.2}
  #allocation0 [shape = 'u32[]', space=smem, size = 0x4, offset = 0x4, fixed_abs, tag = 'smem constant byte address 0x4 - core index']
  #allocation1 [shape = 'u32[144,128]{1,0:T(1,128)}', space=vmem, size = 0x12000, scoped, tag = 'internal scratch']
  #allocation2 [shape = 'f32[2,128]{1,0:T(2,128)}', space=vmem, size = 0x400, scoped, tag = 'scratch operand']
  %s0 = inlined_call_operand.vmem [shape: bf16[2,256,128], index: 0, kind: input, shape index: {}]
  %s1 = inlined_call_operand.vmem [shape: bf16[128,128], index: 1, kind: input, shape index: {}]
  %s2 = inlined_call_operand.vmem [shape: f32[1,128], index: 2, kind: input, shape index: {}]
  %s3 = inlined_call_operand.vmem [shape: bf16[128,128], index: 3, kind: input, shape index: {}]
  %s4 = inlined_call_operand.vmem [shape: f32[1,128], index: 4, kind: input, shape index: {}]
  %s5 = inlined_call_operand.hbm [shape: f32[2,128], index: 5, kind: output, shape index: {}]
  %s6 = sld [smem:[#allocation0]]
  $region102: #{dual_encoder_forward.2} parent=0
    _
  %s8 = ssub.s32 1, %s6
  %s9 = scalar_select 0, %s8, %s6
  $region1: #{dual_encoder_forward.2} parent=0
    #allocation3 [shape = 'u8[131072]{0}', space=vmem, size = 0x20000, scoped, tag = 'input window, operand 0']
    #allocation4 [shape = 'u8[1024]{0}', space=vmem, size = 0x400, scoped, tag = 'output window, operand 0, single buffered']
    #allocation5 [shape = 's32[2]{0}', space=sflag, size = 0x8, scoped, tag = 'scoped memory for dual_encoder_forward.2']
    %10 = vsyncpa [#allocation5], 0
    loop: start=0, step=1, limit=4
    $region2: #{dual_encoder_forward.2} parent=1 // loop_pre_header
      _
    $region3: #{dual_encoder_forward.2} parent=1 // loop_header
      %s12 = sphi 0, %s16
      %p13 = scmp.ge.s32.totalorder %s12, 4
      %s19 = sphi 0, %s31
      %s20 = sphi 0, %s27
      %s21 = sphi 0, %s19
      %s22 = sphi 0, %s20
      %s23 = sphi 0, %s21
      %s24 = sphi 0, %s22
      %s36 = sphi 0, %s38
      %s39 = sphi 0, %s36
      %s40 = sphi 0, %s39
      %s56 = sphi 0, %s40
      %s60 = sphi 0, %s60
      %s62 = sphi 0, %s60
      %s63 = sphi 0, %s62
      %s77 = sphi 0, %s63
      %s81 = sphi 0, %s81
      %s83 = sphi 0, %s81
      %s84 = sphi 0, %s83
      %s98 = sphi 0, %s84
      %s102 = sphi 0, %s102
      %s104 = sphi 0, %s102
      %s105 = sphi 0, %s104
      %s119 = sphi 0, %s105
      %s123 = sphi 0, %s123
      %s125 = sphi 0, %s123
      %s126 = sphi 0, %s125
      %s140 = sphi 0, %s126
      %s146 = sphi 0, %s148
      %s149 = sphi 0, %s146
      %s150 = sphi 0, %s149
      %s166 = sphi 0, %s150
    $region4: #{dual_encoder_forward.2} parent=1 // loop_header_branch
      %15 = sbr.rel (%p13) target = $region8
    $region5: #{dual_encoder_forward.2} parent=1 // loop_body
      %s17 = ssub.s32 %s12, 1
      %s18 = ssub.s32 %s12, 2
      %s25 = sadd.s32 1, %s20
      %p26 = scmp.ge.s32.totalorder %s25, 2
      %s27 = scalar_select %p26, 0, %s25
      %s28 = sadd.s32 1, %s19
      %s29 = scalar_select %p26, %s28, %s19
      %p30 = scmp.ge.s32.totalorder %s29, 1
      %s31 = scalar_select %p30, 0, %s29
      %s32 = ssub.s32 %s19, %s31
      %s33 = ssub.s32 %s20, %s27
      %s34 = sor.u32 %s32, %s33
      %p35 = scmp.eq.s32.totalorder %s34, 0
      %s37 = sadd.s32 %s36, 1
      %s38 = scalar_select %p35, %s36, %s37
      %p41 = pneg %p35
      %p42 = scmp.eq.s32.totalorder %s12, 1
      %p43 = por %p41, %p42
      %p44 = scmp.ne.s32.totalorder %s36, %s39
      %p45 = scmp.eq.s32.totalorder %s12, 0
      %p46 = por %p44, %p45
      %p47 = scmp.ne.s32.totalorder %s36, %s39
      %p48 = scmp.eq.s32.totalorder %s17, 1
      %p49 = por %p47, %p48
      %p50 = scmp.ne.s32.totalorder %s39, %s40
      %p51 = scmp.eq.s32.totalorder %s17, 0
      %p52 = por %p50, %p51
      %p53 = scmp.ne.s32.totalorder %s39, %s40
      %p54 = scmp.eq.s32.totalorder %s18, 1
      %p55 = por %p53, %p54
      %p57 = scmp.ne.s32.totalorder %s40, %s56
      %p58 = scmp.eq.s32.totalorder %s18, 0
      %p59 = por %p57, %p58
      %s61 = sadd.s32 %s60, 1
      %p64 = scmp.eq.s32.totalorder %s12, 1
      %p65 = scmp.ne.s32.totalorder %s60, %s62
      %p66 = scmp.eq.s32.totalorder %s12, 0
      %p67 = por %p65, %p66
      %p68 = scmp.ne.s32.totalorder %s60, %s62
      %p69 = scmp.eq.s32.totalorder %s17, 1
      %p70 = por %p68, %p69
      %p71 = scmp.ne.s32.totalorder %s62, %s63
      %p72 = scmp.eq.s32.totalorder %s17, 0
      %p73 = por %p71, %p72
      %p74 = scmp.ne.s32.totalorder %s62, %s63
      %p75 = scmp.eq.s32.totalorder %s18, 1
      %p76 = por %p74, %p75
      %p78 = scmp.ne.s32.totalorder %s63, %s77
      %p79 = scmp.eq.s32.totalorder %s18, 0
      %p80 = por %p78, %p79
      %s82 = sadd.s32 %s81, 1
      %p85 = scmp.eq.s32.totalorder %s12, 1
      %p86 = scmp.ne.s32.totalorder %s81, %s83
      %p87 = scmp.eq.s32.totalorder %s12, 0
      %p88 = por %p86, %p87
      %p89 = scmp.ne.s32.totalorder %s81, %s83
      %p90 = scmp.eq.s32.totalorder %s17, 1
      %p91 = por %p89, %p90
      %p92 = scmp.ne.s32.totalorder %s83, %s84
      %p93 = scmp.eq.s32.totalorder %s17, 0
      %p94 = por %p92, %p93
      %p95 = scmp.ne.s32.totalorder %s83, %s84
      %p96 = scmp.eq.s32.totalorder %s18, 1
      %p97 = por %p95, %p96
      %p99 = scmp.ne.s32.totalorder %s84, %s98
      %p100 = scmp.eq.s32.totalorder %s18, 0
      %p101 = por %p99, %p100
      %s103 = sadd.s32 %s102, 1
      %p106 = scmp.eq.s32.totalorder %s12, 1
      %p107 = scmp.ne.s32.totalorder %s102, %s104
      %p108 = scmp.eq.s32.totalorder %s12, 0
      %p109 = por %p107, %p108
      %p110 = scmp.ne.s32.totalorder %s102, %s104
      %p111 = scmp.eq.s32.totalorder %s17, 1
      %p112 = por %p110, %p111
      %p113 = scmp.ne.s32.totalorder %s104, %s105
      %p114 = scmp.eq.s32.totalorder %s17, 0
      %p115 = por %p113, %p114
      %p116 = scmp.ne.s32.totalorder %s104, %s105
      %p117 = scmp.eq.s32.totalorder %s18, 1
      %p118 = por %p116, %p117
      %p120 = scmp.ne.s32.totalorder %s105, %s119
      %p121 = scmp.eq.s32.totalorder %s18, 0
      %p122 = por %p120, %p121
      %s124 = sadd.s32 %s123, 1
      %p127 = scmp.eq.s32.totalorder %s12, 1
      %p128 = scmp.ne.s32.totalorder %s123, %s125
      %p129 = scmp.eq.s32.totalorder %s12, 0
      %p130 = por %p128, %p129
      %p131 = scmp.ne.s32.totalorder %s123, %s125
      %p132 = scmp.eq.s32.totalorder %s17, 1
      %p133 = por %p131, %p132
      %p134 = scmp.ne.s32.totalorder %s125, %s126
      %p135 = scmp.eq.s32.totalorder %s17, 0
      %p136 = por %p134, %p135
      %p137 = scmp.ne.s32.totalorder %s125, %s126
      %p138 = scmp.eq.s32.totalorder %s18, 1
      %p139 = por %p137, %p138
      %p141 = scmp.ne.s32.totalorder %s126, %s140
      %p142 = scmp.eq.s32.totalorder %s18, 0
      %p143 = por %p141, %p142
      %s144 = ssub.s32 %s19, %s31
      %p145 = scmp.eq.s32.totalorder %s144, 0
      %s147 = sadd.s32 %s146, 1
      %s148 = scalar_select %p145, %s146, %s147
      %p151 = pneg %p145
      %p152 = scmp.eq.s32.totalorder %s12, 1
      %p153 = por %p151, %p152
      %p154 = scmp.ne.s32.totalorder %s146, %s149
      %p155 = scmp.eq.s32.totalorder %s12, 0
      %p156 = por %p154, %p155
      %p157 = scmp.ne.s32.totalorder %s146, %s149
      %p158 = scmp.eq.s32.totalorder %s17, 1
      %p159 = por %p157, %p158
      %p160 = scmp.ne.s32.totalorder %s149, %s150
      %p161 = scmp.eq.s32.totalorder %s17, 0
      %p162 = por %p160, %p161
      %p163 = scmp.ne.s32.totalorder %s149, %s150
      %p164 = scmp.eq.s32.totalorder %s18, 1
      %p165 = por %p163, %p164
      %p167 = scmp.ne.s32.totalorder %s150, %s166
      %p168 = scmp.eq.s32.totalorder %s18, 0
      %p169 = por %p167, %p168
      %p170 = scmp.le.s32.totalorder 1, %s12
      %p171 = scmp.lt.s32.totalorder %s12, 3
      %p172 = pnand %p170, %p171
      %p173 = pneg %p172
      // Predicated region
      $region9: #{dual_encoder_forward.2} parent=5 // pred_check
        _
      $region10: #{dual_encoder_forward.2} parent=5 // pred_check_branch
        %175 = sbr.rel (%p172) target = $region12
      $region11: #{dual_encoder_forward.2} parent=5 // pred_region
        %s176 = ssub.s32 %s12, 1
        // Predicated region
        $region13: #{dual_encoder_forward.2} parent=11 // pred_check
          %p177 = pneg %p73
        $region14: #{dual_encoder_forward.2} parent=11 // pred_check_branch
          %179 = sbr.rel (%p177) target = $region16
        $region15: #{dual_encoder_forward.2} parent=11 // pred_region
          _
        $region16: #{dual_encoder_forward.2} parent=11 // pred_fallthru
          _
        // Predicated region
        $region17: #{dual_encoder_forward.2} parent=11 // pred_check
          %p180 = pneg %p94
        $region18: #{dual_encoder_forward.2} parent=11 // pred_check_branch
          %182 = sbr.rel (%p180) target = $region20
        $region19: #{dual_encoder_forward.2} parent=11 // pred_region
          _
        $region20: #{dual_encoder_forward.2} parent=11 // pred_fallthru
          _
        // Predicated region
        $region21: #{dual_encoder_forward.2} parent=11 // pred_check
          %p183 = pneg %p115
        $region22: #{dual_encoder_forward.2} parent=11 // pred_check_branch
          %185 = sbr.rel (%p183) target = $region24
        $region23: #{dual_encoder_forward.2} parent=11 // pred_region
          _
        $region24: #{dual_encoder_forward.2} parent=11 // pred_fallthru
          _
        // Predicated region
        $region25: #{dual_encoder_forward.2} parent=11 // pred_check
          %p186 = pneg %p136
        $region26: #{dual_encoder_forward.2} parent=11 // pred_check_branch
          %188 = sbr.rel (%p186) target = $region28
        $region27: #{dual_encoder_forward.2} parent=11 // pred_region
          _
        $region28: #{dual_encoder_forward.2} parent=11 // pred_fallthru
          _
      $region12: #{dual_encoder_forward.2} parent=5 // pred_fallthru
        _
      %p189 = scmp.lt.s32.totalorder %s12, 2
      // Predicated region
      $region29: #{dual_encoder_forward.2} parent=5 // pred_check
        %p190 = pneg %p189
      $region30: #{dual_encoder_forward.2} parent=5 // pred_check_branch
        %192 = sbr.rel (%p190) target = $region32
      $region31: #{dual_encoder_forward.2} parent=5 // pred_region
        // Predicated region
        $region33: #{dual_encoder_forward.2} parent=31 // pred_check
          %p193 = pneg %p46
        $region34: #{dual_encoder_forward.2} parent=31 // pred_check_branch
          %195 = sbr.rel (%p193) target = $region36
        $region35: #{dual_encoder_forward.2} parent=31 // pred_region
          %s196 = sand.u32 %s36, 1
          %s197 = sand.u32 %s36, 1
          %s198 = smul.addr %s197, 128
          %s199 = scalar_lea.vmem [#allocation3], %s198
          %s200 = smul.u32 2, %s19
          %s201 = smul.u32 16, %s20
          %s202 = smul.addr %s200, 32
          %s203 = sadd.s32 %s201, %s202
          %s204 = smul.addr %s203, 4
          %s205 = scalar_lea.vmem %s0, %s204
          // Predicated region
          $region37: #{dual_encoder_forward.2} parent=35 // pred_check
            _
          $region38: #{dual_encoder_forward.2} parent=35 // pred_check_branch
            %207 = sbr.rel (0) target = $region40
          $region39: #{dual_encoder_forward.2} parent=35 // pred_region
            // Predicated region
            $region41: #{dual_encoder_forward.2} parent=39 // pred_check
              _
            $region42: #{dual_encoder_forward.2} parent=39 // pred_check_branch
              %209 = sbr.rel target = $region44
            $region43: #{dual_encoder_forward.2} parent=39 // pred_region
              // Predicated region
              $region56: #{dual_encoder_forward.2} parent=43 // pred_check
                _
              $region57: #{dual_encoder_forward.2} parent=43 // pred_check_branch
                %287 = sbr.rel (0) target = $region59
              $region58: #{dual_encoder_forward.2} parent=43 // pred_region
                loop: start=0, step=1, limit=1
                $region60: #{dual_encoder_forward.2} parent=58 // loop_pre_header
                  _
                $region61: #{dual_encoder_forward.2} parent=58 // loop_header
                  %s289 = sphi 0, %s293
                  %p290 = scmp.ge.s32.totalorder %s289, 1
                  %s294 = sphi %s205, %s205
                  %s295 = sphi %s199, %s199
                $region62: #{dual_encoder_forward.2} parent=58 // loop_header_branch
                  %292 = sbr.rel (%p290) target = $region66
                $region63: #{dual_encoder_forward.2} parent=58 // loop_body
                  _
                $region64: #{dual_encoder_forward.2} parent=58 // loop_footer
                  %s293 = sadd.s32 1, %s289
                $region65: #{dual_encoder_forward.2} parent=58 // loop_footer_branch
                  %288 = sbr.rel target = $region61
                $region66: #{dual_encoder_forward.2} parent=58 // loop_exit
                  _
                %s297 = ssub.s32 16, 1
                loop: start=0, step=1, limit=1
                $region67: #{dual_encoder_forward.2} parent=58 // loop_pre_header
                  _
                $region68: #{dual_encoder_forward.2} parent=58 // loop_header
                  %s299 = sphi 0, %s303
                  %p300 = scmp.ge.s32.totalorder %s299, 1
                  %s304 = sphi %s205, %s205
                  %s305 = sphi %s199, %s199
                $region69: #{dual_encoder_forward.2} parent=58 // loop_header_branch
                  %302 = sbr.rel (%p300) target = $region73
                $region70: #{dual_encoder_forward.2} parent=58 // loop_body
                  %v306 = vld [vmem:[%s304] sm:%s297]
                  %307 = vst [vmem:[%s305] sm:%s297] %v306
                  %v308 = vld [vmem:[%s304 + $0x4] sm:%s297]
                  %309 = vst [vmem:[%s305 + $0x4] sm:%s297] %v308
                  %v310 = vld [vmem:[%s304 + $0x8] sm:%s297]
                  %311 = vst [vmem:[%s305 + $0x8] sm:%s297] %v310
                  %v312 = vld [vmem:[%s304 + $0xc] sm:%s297]
                  %313 = vst [vmem:[%s305 + $0xc] sm:%s297] %v312
                  %v314 = vld [vmem:[%s304 + $0x10] sm:%s297]
                  %315 = vst [vmem:[%s305 + $0x10] sm:%s297] %v314
                  %v316 = vld [vmem:[%s304 + $0x14] sm:%s297]
                  %317 = vst [vmem:[%s305 + $0x14] sm:%s297] %v316
                  %v318 = vld [vmem:[%s304 + $0x18] sm:%s297]
                  %319 = vst [vmem:[%s305 + $0x18] sm:%s297] %v318
                  %v320 = vld [vmem:[%s304 + $0x1c] sm:%s297]
                  %321 = vst [vmem:[%s305 + $0x1c] sm:%s297] %v320
                  %v322 = vld [vmem:[%s304 + $0x20] sm:%s297]
                  %323 = vst [vmem:[%s305 + $0x20] sm:%s297] %v322
                  %v324 = vld [vmem:[%s304 + $0x24] sm:%s297]
                  %325 = vst [vmem:[%s305 + $0x24] sm:%s297] %v324
                  %v326 = vld [vmem:[%s304 + $0x28] sm:%s297]
                  %327 = vst [vmem:[%s305 + $0x28] sm:%s297] %v326
                  %v328 = vld [vmem:[%s304 + $0x2c] sm:%s297]
                  %329 = vst [vmem:[%s305 + $0x2c] sm:%s297] %v328
                  %v330 = vld [vmem:[%s304 + $0x30] sm:%s297]
                  %331 = vst [vmem:[%s305 + $0x30] sm:%s297] %v330
                  %v332 = vld [vmem:[%s304 + $0x34] sm:%s297]
                  %333 = vst [vmem:[%s305 + $0x34] sm:%s297] %v332
                  %v334 = vld [vmem:[%s304 + $0x38] sm:%s297]
                  %335 = vst [vmem:[%s305 + $0x38] sm:%s297] %v334
                  %v336 = vld [vmem:[%s304 + $0x3c] sm:%s297]
                  %337 = vst [vmem:[%s305 + $0x3c] sm:%s297] %v336
                  %v338 = vld [vmem:[%s304 + $0x80] sm:%s297]
                  %339 = vst [vmem:[%s305 + $0x40] sm:%s297] %v338
                  %v340 = vld [vmem:[%s304 + $0x84] sm:%s297]
                  %341 = vst [vmem:[%s305 + $0x44] sm:%s297] %v340
                  %v342 = vld [vmem:[%s304 + $0x88] sm:%s297]
                  %343 = vst [vmem:[%s305 + $0x48] sm:%s297] %v342
                  %v344 = vld [vmem:[%s304 + $0x8c] sm:%s297]
                  %345 = vst [vmem:[%s305 + $0x4c] sm:%s297] %v344
                  %v346 = vld [vmem:[%s304 + $0x90] sm:%s297]
                  %347 = vst [vmem:[%s305 + $0x50] sm:%s297] %v346
                  %v348 = vld [vmem:[%s304 + $0x94] sm:%s297]
                  %349 = vst [vmem:[%s305 + $0x54] sm:%s297] %v348
                  %v350 = vld [vmem:[%s304 + $0x98] sm:%s297]
                  %351 = vst [vmem:[%s305 + $0x58] sm:%s297] %v350
                  %v352 = vld [vmem:[%s304 + $0x9c] sm:%s297]
                  %353 = vst [vmem:[%s305 + $0x5c] sm:%s297] %v352
                  %v354 = vld [vmem:[%s304 + $0xa0] sm:%s297]
                  %355 = vst [vmem:[%s305 + $0x60] sm:%s297] %v354
                  %v356 = vld [vmem:[%s304 + $0xa4] sm:%s297]
                  %357 = vst [vmem:[%s305 + $0x64] sm:%s297] %v356
                  %v358 = vld [vmem:[%s304 + $0xa8] sm:%s297]
                  %359 = vst [vmem:[%s305 + $0x68] sm:%s297] %v358
                  %v360 = vld [vmem:[%s304 + $0xac] sm:%s297]
                  %361 = vst [vmem:[%s305 + $0x6c] sm:%s297] %v360
                  %v362 = vld [vmem:[%s304 + $0xb0] sm:%s297]
                  %363 = vst [vmem:[%s305 + $0x70] sm:%s297] %v362
                  %v364 = vld [vmem:[%s304 + $0xb4] sm:%s297]
                  %365 = vst [vmem:[%s305 + $0x74] sm:%s297] %v364
                  %v366 = vld [vmem:[%s304 + $0xb8] sm:%s297]
                  %367 = vst [vmem:[%s305 + $0x78] sm:%s297] %v366
                  %v368 = vld [vmem:[%s304 + $0xbc] sm:%s297]
                  %369 = vst [vmem:[%s305 + $0x7c] sm:%s297] %v368
                $region71: #{dual_encoder_forward.2} parent=58 // loop_footer
                  %s303 = sadd.s32 1, %s299
                $region72: #{dual_encoder_forward.2} parent=58 // loop_footer_branch
                  %298 = sbr.rel target = $region68
                $region73: #{dual_encoder_forward.2} parent=58 // loop_exit
                  _
              $region59: #{dual_encoder_forward.2} parent=43 // pred_fallthru
                _
            $region44: #{dual_encoder_forward.2} parent=39 // pred_fallthru
              _
            // Predicated region
            $region45: #{dual_encoder_forward.2} parent=39 // pred_check
              _
            $region46: #{dual_encoder_forward.2} parent=39 // pred_check_branch
              %211 = sbr.rel (0) target = $region48
            $region47: #{dual_encoder_forward.2} parent=39 // pred_region
              %s213 = ssub.s32 16, 1
              loop: start=0, step=1, limit=1
              $region49: #{dual_encoder_forward.2} parent=47 // loop_pre_header
                _
              $region50: #{dual_encoder_forward.2} parent=47 // loop_header
                %s215 = sphi 0, %s219
                %p216 = scmp.ge.s32.totalorder %s215, 1
                %s220 = sphi %s205, %s205
                %s221 = sphi %s199, %s199
              $region51: #{dual_encoder_forward.2} parent=47 // loop_header_branch
                %218 = sbr.rel (%p216) target = $region55
              $region52: #{dual_encoder_forward.2} parent=47 // loop_body
                %v222 = vld [vmem:[%s220] sm:%s213]
                %223 = vst [vmem:[%s221] sm:%s213] %v222
                %v224 = vld [vmem:[%s220 + $0x4] sm:%s213]
                %225 = vst [vmem:[%s221 + $0x4] sm:%s213] %v224
                %v226 = vld [vmem:[%s220 + $0x8] sm:%s213]
                %227 = vst [vmem:[%s221 + $0x8] sm:%s213] %v226
                %v228 = vld [vmem:[%s220 + $0xc] sm:%s213]
                %229 = vst [vmem:[%s221 + $0xc] sm:%s213] %v228
                %v230 = vld [vmem:[%s220 + $0x10] sm:%s213]
                %231 = vst [vmem:[%s221 + $0x10] sm:%s213] %v230
                %v232 = vld [vmem:[%s220 + $0x14] sm:%s213]
                %233 = vst [vmem:[%s221 + $0x14] sm:%s213] %v232
                %v234 = vld [vmem:[%s220 + $0x18] sm:%s213]
                %235 = vst [vmem:[%s221 + $0x18] sm:%s213] %v234
                %v236 = vld [vmem:[%s220 + $0x1c] sm:%s213]
                %237 = vst [vmem:[%s221 + $0x1c] sm:%s213] %v236
                %v238 = vld [vmem:[%s220 + $0x20] sm:%s213]
                %239 = vst [vmem:[%s221 + $0x20] sm:%s213] %v238
                %v240 = vld [vmem:[%s220 + $0x24] sm:%s213]
                %241 = vst [vmem:[%s221 + $0x24] sm:%s213] %v240
                %v242 = vld [vmem:[%s220 + $0x28] sm:%s213]
                %243 = vst [vmem:[%s221 + $0x28] sm:%s213] %v242
                %v244 = vld [vmem:[%s220 + $0x2c] sm:%s213]
                %245 = vst [vmem:[%s221 + $0x2c] sm:%s213] %v244
                %v246 = vld [vmem:[%s220 + $0x30] sm:%s213]
                %247 = vst [vmem:[%s221 + $0x30] sm:%s213] %v246
                %v248 = vld [vmem:[%s220 + $0x34] sm:%s213]
                %249 = vst [vmem:[%s221 + $0x34] sm:%s213] %v248
                %v250 = vld [vmem:[%s220 + $0x38] sm:%s213]
                %251 = vst [vmem:[%s221 + $0x38] sm:%s213] %v250
                %v252 = vld [vmem:[%s220 + $0x3c] sm:%s213]
                %253 = vst [vmem:[%s221 + $0x3c] sm:%s213] %v252
                %v254 = vld [vmem:[%s220 + $0x80] sm:%s213]
                %255 = vst [vmem:[%s221 + $0x40] sm:%s213] %v254
                %v256 = vld [vmem:[%s220 + $0x84] sm:%s213]
                %257 = vst [vmem:[%s221 + $0x44] sm:%s213] %v256
                %v258 = vld [vmem:[%s220 + $0x88] sm:%s213]
                %259 = vst [vmem:[%s221 + $0x48] sm:%s213] %v258
                %v260 = vld [vmem:[%s220 + $0x8c] sm:%s213]
                %261 = vst [vmem:[%s221 + $0x4c] sm:%s213] %v260
                %v262 = vld [vmem:[%s220 + $0x90] sm:%s213]
                %263 = vst [vmem:[%s221 + $0x50] sm:%s213] %v262
                %v264 = vld [vmem:[%s220 + $0x94] sm:%s213]
                %265 = vst [vmem:[%s221 + $0x54] sm:%s213] %v264
                %v266 = vld [vmem:[%s220 + $0x98] sm:%s213]
                %267 = vst [vmem:[%s221 + $0x58] sm:%s213] %v266
                %v268 = vld [vmem:[%s220 + $0x9c] sm:%s213]
                %269 = vst [vmem:[%s221 + $0x5c] sm:%s213] %v268
                %v270 = vld [vmem:[%s220 + $0xa0] sm:%s213]
                %271 = vst [vmem:[%s221 + $0x60] sm:%s213] %v270
                %v272 = vld [vmem:[%s220 + $0xa4] sm:%s213]
                %273 = vst [vmem:[%s221 + $0x64] sm:%s213] %v272
                %v274 = vld [vmem:[%s220 + $0xa8] sm:%s213]
                %275 = vst [vmem:[%s221 + $0x68] sm:%s213] %v274
                %v276 = vld [vmem:[%s220 + $0xac] sm:%s213]
                %277 = vst [vmem:[%s221 + $0x6c] sm:%s213] %v276
                %v278 = vld [vmem:[%s220 + $0xb0] sm:%s213]
                %279 = vst [vmem:[%s221 + $0x70] sm:%s213] %v278
                %v280 = vld [vmem:[%s220 + $0xb4] sm:%s213]
                %281 = vst [vmem:[%s221 + $0x74] sm:%s213] %v280
                %v282 = vld [vmem:[%s220 + $0xb8] sm:%s213]
                %283 = vst [vmem:[%s221 + $0x78] sm:%s213] %v282
                %v284 = vld [vmem:[%s220 + $0xbc] sm:%s213]
                %285 = vst [vmem:[%s221 + $0x7c] sm:%s213] %v284
              $region53: #{dual_encoder_forward.2} parent=47 // loop_footer
                %s219 = sadd.s32 1, %s215
              $region54: #{dual_encoder_forward.2} parent=47 // loop_footer_branch
                %214 = sbr.rel target = $region50
              $region55: #{dual_encoder_forward.2} parent=47 // loop_exit
                _
            $region48: #{dual_encoder_forward.2} parent=39 // pred_fallthru
              _
          $region40: #{dual_encoder_forward.2} parent=35 // pred_fallthru
            _
          %370 = vnop
        $region36: #{dual_encoder_forward.2} parent=31 // pred_fallthru
          _
      $region32: #{dual_encoder_forward.2} parent=5 // pred_fallthru
        _
      %p371 = scmp.le.s32.totalorder 1, %s12
      %p372 = scmp.lt.s32.totalorder %s12, 3
      %p373 = pnand %p371, %p372
      %p374 = pneg %p373
      // Predicated region
      $region74: #{dual_encoder_forward.2} parent=5 // pred_check
        _
      $region75: #{dual_encoder_forward.2} parent=5 // pred_check_branch
        %376 = sbr.rel (%p373) target = $region77
      $region76: #{dual_encoder_forward.2} parent=5 // pred_region
        %s377 = ssub.s32 %s12, 1
        %s378 = sand.u32 %s39, 1
        %s379 = sand.u32 %s39, 1
        %s380 = smul.addr %s379, 128
        %s381 = scalar_lea.vmem [#allocation3], %s380
        // Predicated region
        $region78: #{dual_encoder_forward.2} parent=76 // pred_check
          %p382 = pneg %p52
        $region79: #{dual_encoder_forward.2} parent=76 // pred_check_branch
          %384 = sbr.rel (%p382) target = $region81
        $region80: #{dual_encoder_forward.2} parent=76 // pred_region
          _
        $region81: #{dual_encoder_forward.2} parent=76 // pred_fallthru
          _
        %s385 = sand.u32 %s39, 1
        %s386 = sand.u32 %s39, 1
        %s387 = smul.addr %s386, 128
        %s388 = scalar_lea.vmem [#allocation3], %s387
        %p389 = pneg %p52
        %p390 = pneg %p49
        %p391 = pneg %p73
        %p392 = pneg %p70
        %p393 = pneg %p94
        %p394 = pneg %p91
        %p395 = pneg %p115
        %p396 = pneg %p112
        %p397 = pneg %p136
        %p398 = pneg %p133
        %p399 = pneg %p162
        %p400 = pneg %p159
        %s401 = smul.u32 2, %s21
        %s402 = smul.u32 16, %s22
        %p404 = scmp.eq.s32.totalorder %s22, 0
        // Predicated region
        $region82: #{dual_encoder_forward.2} parent=76 // pred_check
          %p405 = pneg %p404
        $region83: #{dual_encoder_forward.2} parent=76 // pred_check_branch
          %407 = sbr.rel (%p405) target = $region85
        $region84: #{dual_encoder_forward.2} parent=76 // pred_region
          %408 = vst [vmem:[#allocation2] sm:$0x3] 0.0
        $region85: #{dual_encoder_forward.2} parent=76 // pred_fallthru
          _
        %v409 = vld [vmem:[%s381] sm:$0xf]
        %v410 = vld [vmem:[%s381 + $0x4] sm:$0xf]
        %v411 = vld [vmem:[%s381 + $0x8] sm:$0xf]
        %v412 = vld [vmem:[%s381 + $0xc] sm:$0xf]
        %v413 = vld [vmem:[%s381 + $0x10] sm:$0xf]
        %v414 = vld [vmem:[%s381 + $0x14] sm:$0xf]
        %v415 = vld [vmem:[%s381 + $0x18] sm:$0xf]
        %v416 = vld [vmem:[%s381 + $0x1c] sm:$0xf]
        %v417 = vld [vmem:[%s381 + $0x20] sm:$0xf]
        %v418 = vld [vmem:[%s381 + $0x24] sm:$0xf]
        %v419 = vld [vmem:[%s381 + $0x28] sm:$0xf]
        %v420 = vld [vmem:[%s381 + $0x2c] sm:$0xf]
        %v421 = vld [vmem:[%s381 + $0x30] sm:$0xf]
        %v422 = vld [vmem:[%s381 + $0x34] sm:$0xf]
        %v423 = vld [vmem:[%s381 + $0x38] sm:$0xf]
        %v424 = vld [vmem:[%s381 + $0x3c] sm:$0xf]
        %v425 = vld [vmem:[%s381 + $0x40] sm:$0xf]
        %v426 = vld [vmem:[%s381 + $0x44] sm:$0xf]
        %v427 = vld [vmem:[%s381 + $0x48] sm:$0xf]
        %v428 = vld [vmem:[%s381 + $0x4c] sm:$0xf]
        %v429 = vld [vmem:[%s381 + $0x50] sm:$0xf]
        %v430 = vld [vmem:[%s381 + $0x54] sm:$0xf]
        %v431 = vld [vmem:[%s381 + $0x58] sm:$0xf]
        %v432 = vld [vmem:[%s381 + $0x5c] sm:$0xf]
        %v433 = vld [vmem:[%s381 + $0x60] sm:$0xf]
        %v434 = vld [vmem:[%s381 + $0x64] sm:$0xf]
        %v435 = vld [vmem:[%s381 + $0x68] sm:$0xf]
        %v436 = vld [vmem:[%s381 + $0x6c] sm:$0xf]
        %v437 = vld [vmem:[%s381 + $0x70] sm:$0xf]
        %v438 = vld [vmem:[%s381 + $0x74] sm:$0xf]
        %v439 = vld [vmem:[%s381 + $0x78] sm:$0xf]
        %v440 = vld [vmem:[%s381 + $0x7c] sm:$0xf]
        %v441 = vld [vmem:[%s1] sm:$0xf]
        %v442 = vld [vmem:[%s1 + $0x4] sm:$0xf]
        %v443 = vld [vmem:[%s1 + $0x8] sm:$0xf]
        %v444 = vld [vmem:[%s1 + $0xc] sm:$0xf]
        %v445 = vld [vmem:[%s1 + $0x10] sm:$0xf]
        %v446 = vld [vmem:[%s1 + $0x14] sm:$0xf]
        %v447 = vld [vmem:[%s1 + $0x18] sm:$0xf]
        %v448 = vld [vmem:[%s1 + $0x1c] sm:$0xf]
        %v449 = vld [vmem:[%s1 + $0x20] sm:$0xf]
        %v450 = vld [vmem:[%s1 + $0x24] sm:$0xf]
        %v451 = vld [vmem:[%s1 + $0x28] sm:$0xf]
        %v452 = vld [vmem:[%s1 + $0x2c] sm:$0xf]
        %v453 = vld [vmem:[%s1 + $0x30] sm:$0xf]
        %v454 = vld [vmem:[%s1 + $0x34] sm:$0xf]
        %v455 = vld [vmem:[%s1 + $0x38] sm:$0xf]
        %v456 = vld [vmem:[%s1 + $0x3c] sm:$0xf]
        %v457 = vld [vmem:[%s2] sm:$0x1]
        %v459 = vlaneseq
        %v460 = vshrl.u32 %v459, 7
        %v461 = vsub.s32 0, %v460
        %v462 = vrot.slane %v457, %v461
        %v496 = vunpack.c.l.b16 %v409
        %v497 = vunpack.c.l.b16 %v410
        %v498 = vunpack.c.l.b16 %v411
        %v499 = vunpack.c.l.b16 %v412
        %v500 = vunpack.c.l.b16 %v413
        %v501 = vunpack.c.l.b16 %v414
        %v502 = vunpack.c.l.b16 %v415
        %v503 = vunpack.c.l.b16 %v416
        %v504 = vunpack.c.l.b16 %v417
        %v505 = vunpack.c.l.b16 %v418
        %v506 = vunpack.c.l.b16 %v419
        %v507 = vunpack.c.l.b16 %v420
        %v508 = vunpack.c.l.b16 %v421
        %v509 = vunpack.c.l.b16 %v422
        %v510 = vunpack.c.l.b16 %v423
        %v511 = vunpack.c.l.b16 %v424
        %v512 = vunpack.c.l.b16 %v425
        %v513 = vunpack.c.l.b16 %v426
        %v514 = vunpack.c.l.b16 %v427
        %v515 = vunpack.c.l.b16 %v428
        %v516 = vunpack.c.l.b16 %v429
        %v517 = vunpack.c.l.b16 %v430
        %v518 = vunpack.c.l.b16 %v431
        %v519 = vunpack.c.l.b16 %v432
        %v520 = vunpack.c.l.b16 %v433
        %v521 = vunpack.c.l.b16 %v434
        %v522 = vunpack.c.l.b16 %v435
        %v523 = vunpack.c.l.b16 %v436
        %v524 = vunpack.c.l.b16 %v437
        %v525 = vunpack.c.l.b16 %v438
        %v526 = vunpack.c.l.b16 %v439
        %v527 = vunpack.c.l.b16 %v440
        %v528 = vpack.c.b16 %v497, %v496
        %v529 = vpack.c.b16 %v499, %v498
        %v530 = vpack.c.b16 %v501, %v500
        %v531 = vpack.c.b16 %v503, %v502
        %v532 = vpack.c.b16 %v505, %v504
        %v533 = vpack.c.b16 %v507, %v506
        %v534 = vpack.c.b16 %v509, %v508
        %v535 = vpack.c.b16 %v511, %v510
        %v536 = vpack.c.b16 %v513, %v512
        %v537 = vpack.c.b16 %v515, %v514
        %v538 = vpack.c.b16 %v517, %v516
        %v539 = vpack.c.b16 %v519, %v518
        %v540 = vpack.c.b16 %v521, %v520
        %v541 = vpack.c.b16 %v523, %v522
        %v542 = vpack.c.b16 %v525, %v524
        %v543 = vpack.c.b16 %v527, %v526
        %v576 = vunpack.c.l.b16 %v441
        %v577 = vunpack.c.l.b16 %v442
        %v578 = vunpack.c.l.b16 %v443
        %v579 = vunpack.c.l.b16 %v444
        %v580 = vunpack.c.l.b16 %v445
        %v581 = vunpack.c.l.b16 %v446
        %v582 = vunpack.c.l.b16 %v447
        %v583 = vunpack.c.l.b16 %v448
        %v584 = vunpack.c.l.b16 %v449
        %v585 = vunpack.c.l.b16 %v450
        %v586 = vunpack.c.l.b16 %v451
        %v587 = vunpack.c.l.b16 %v452
        %v588 = vunpack.c.l.b16 %v453
        %v589 = vunpack.c.l.b16 %v454
        %v590 = vunpack.c.l.b16 %v455
        %v591 = vunpack.c.l.b16 %v456
        %v592 = vpack.c.b16 %v577, %v576
        %v593 = vpack.c.b16 %v579, %v578
        %v594 = vpack.c.b16 %v581, %v580
        %v595 = vpack.c.b16 %v583, %v582
        %v596 = vpack.c.b16 %v585, %v584
        %v597 = vpack.c.b16 %v587, %v586
        %v598 = vpack.c.b16 %v589, %v588
        %v599 = vpack.c.b16 %v591, %v590
        %608 = vmatprep.subr.bf16.mxu0 0
        %609 = vmatpush1.bf16.msra.mxu0 %v599
        %610 = vmatprep.subr.bf16.mxu0 0
        %611 = vmatpush1.bf16.msra.mxu0 %v598
        %612 = vmatprep.subr.bf16.mxu0 0
        %613 = vmatpush1.bf16.msra.mxu0 %v597
        %614 = vmatprep.subr.bf16.mxu0 0
        %615 = vmatpush1.bf16.msra.mxu0 %v596
        %616 = vmatprep.subr.bf16.mxu0 0
        %617 = vmatpush1.bf16.msra.mxu0 %v595
        %618 = vmatprep.subr.bf16.mxu0 0
        %619 = vmatpush1.bf16.msra.mxu0 %v594
        %620 = vmatprep.subr.bf16.mxu0 0
        %621 = vmatpush1.bf16.msra.mxu0 %v593
        %622 = vmatprep.subr.bf16.mxu0 0
        %623 = vmatpush1.bf16.msra.mxu0 %v592
        %624 = vmatprep.subr.bf16.mxu0 0
        %625 = vmatpush2.bf16.msra.mxu0 0
        %626 = vmatprep.subr.bf16.mxu0 0
        %627 = vmatpush2.bf16.msra.mxu0 0
        %628 = vmatprep.subr.bf16.mxu0 0
        %629 = vmatpush2.bf16.msra.mxu0 0
        %630 = vmatprep.subr.bf16.mxu0 0
        %631 = vmatpush2.bf16.msra.mxu0 0
        %632 = vmatprep.subr.bf16.mxu0 0
        %633 = vmatpush2.bf16.msra.mxu0 0
        %634 = vmatprep.subr.bf16.mxu0 0
        %635 = vmatpush2.bf16.msra.mxu0 0
        %636 = vmatprep.subr.bf16.mxu0 0
        %637 = vmatpush2.bf16.msra.mxu0 0
        %638 = vmatprep.subr.bf16.mxu0 0
        %639 = vmatpush2.bf16.msra.mxu0 0
        %640 = vmatprep.mubr.bf16.mxu0 0
        %641 = vmatmul.mubr.bf16.gmra.mxu0 %v528
        %v642 = vpop.f32.mrf.mxu0
        %v643 = vadd.f32 %v462, %v642
        %v644 = vpop.f32.mrf.mxu0
        %v645 = vpop.f32.mrf.mxu0
        %v646 = vadd.f32 %v462, %v645
        %v647 = vpop.f32.mrf.mxu0
        %648 = vmatprep.mubr.bf16.mxu0 0
        %649 = vmatmul.mubr.bf16.gmra.mxu0 %v529
        %v650 = vpop.f32.mrf.mxu0
        %v651 = vadd.f32 %v462, %v650
        %v652 = vpop.f32.mrf.mxu0
        %v653 = vpop.f32.mrf.mxu0
        %v654 = vadd.f32 %v462, %v653
        %v655 = vpop.f32.mrf.mxu0
        %656 = vmatprep.mubr.bf16.mxu0 0
        %657 = vmatmul.mubr.bf16.gmra.mxu0 %v530
        %v658 = vpop.f32.mrf.mxu0
        %v659 = vadd.f32 %v462, %v658
        %v660 = vpop.f32.mrf.mxu0
        %v661 = vpop.f32.mrf.mxu0
        %v662 = vadd.f32 %v462, %v661
        %v663 = vpop.f32.mrf.mxu0
        %664 = vmatprep.mubr.bf16.mxu0 0
        %665 = vmatmul.mubr.bf16.gmra.mxu0 %v531
        %v666 = vpop.f32.mrf.mxu0
        %v667 = vadd.f32 %v462, %v666
        %v668 = vpop.f32.mrf.mxu0
        %v669 = vpop.f32.mrf.mxu0
        %v670 = vadd.f32 %v462, %v669
        %v671 = vpop.f32.mrf.mxu0
        %672 = vmatprep.mubr.bf16.mxu0 0
        %673 = vmatmul.mubr.bf16.gmra.mxu0 %v532
        %v674 = vpop.f32.mrf.mxu0
        %v675 = vadd.f32 %v462, %v674
        %v676 = vpop.f32.mrf.mxu0
        %v677 = vpop.f32.mrf.mxu0
        %v678 = vadd.f32 %v462, %v677
        %v679 = vpop.f32.mrf.mxu0
        %680 = vmatprep.mubr.bf16.mxu0 0
        %681 = vmatmul.mubr.bf16.gmra.mxu0 %v533
        %v682 = vpop.f32.mrf.mxu0
        %v683 = vadd.f32 %v462, %v682
        %v684 = vpop.f32.mrf.mxu0
        %v685 = vpop.f32.mrf.mxu0
        %v686 = vadd.f32 %v462, %v685
        %v687 = vpop.f32.mrf.mxu0
        %688 = vmatprep.mubr.bf16.mxu0 0
        %689 = vmatmul.mubr.bf16.gmra.mxu0 %v534
        %v690 = vpop.f32.mrf.mxu0
        %v691 = vadd.f32 %v462, %v690
        %v692 = vpop.f32.mrf.mxu0
        %v693 = vpop.f32.mrf.mxu0
        %v694 = vadd.f32 %v462, %v693
        %v695 = vpop.f32.mrf.mxu0
        %696 = vmatprep.mubr.bf16.mxu0 0
        %697 = vmatmul.mubr.bf16.gmra.mxu0 %v535
        %v698 = vpop.f32.mrf.mxu0
        %v699 = vadd.f32 %v462, %v698
        %v700 = vpop.f32.mrf.mxu0
        %v701 = vpop.f32.mrf.mxu0
        %v702 = vadd.f32 %v462, %v701
        %v703 = vpop.f32.mrf.mxu0
        %704 = vmatprep.mubr.bf16.mxu0 0
        %705 = vmatmul.mubr.bf16.gmra.mxu0 %v536
        %v706 = vpop.f32.mrf.mxu0
        %v707 = vadd.f32 %v462, %v706
        %v708 = vpop.f32.mrf.mxu0
        %v709 = vpop.f32.mrf.mxu0
        %v710 = vadd.f32 %v462, %v709
        %v711 = vpop.f32.mrf.mxu0
        %712 = vmatprep.mubr.bf16.mxu0 0
        %713 = vmatmul.mubr.bf16.gmra.mxu0 %v537
        %v714 = vpop.f32.mrf.mxu0
        %v715 = vadd.f32 %v462, %v714
        %v716 = vpop.f32.mrf.mxu0
        %v717 = vpop.f32.mrf.mxu0
        %v718 = vadd.f32 %v462, %v717
        %v719 = vpop.f32.mrf.mxu0
        %720 = vmatprep.mubr.bf16.mxu0 0
        %721 = vmatmul.mubr.bf16.gmra.mxu0 %v538
        %v722 = vpop.f32.mrf.mxu0
        %v723 = vadd.f32 %v462, %v722
        %v724 = vpop.f32.mrf.mxu0
        %v725 = vpop.f32.mrf.mxu0
        %v726 = vadd.f32 %v462, %v725
        %v727 = vpop.f32.mrf.mxu0
        %728 = vmatprep.mubr.bf16.mxu0 0
        %729 = vmatmul.mubr.bf16.gmra.mxu0 %v539
        %v730 = vpop.f32.mrf.mxu0
        %v731 = vadd.f32 %v462, %v730
        %v732 = vpop.f32.mrf.mxu0
        %v733 = vpop.f32.mrf.mxu0
        %v734 = vadd.f32 %v462, %v733
        %v735 = vpop.f32.mrf.mxu0
        %736 = vmatprep.mubr.bf16.mxu0 0
        %737 = vmatmul.mubr.bf16.gmra.mxu0 %v540
        %v738 = vpop.f32.mrf.mxu0
        %v739 = vadd.f32 %v462, %v738
        %v740 = vpop.f32.mrf.mxu0
        %v741 = vpop.f32.mrf.mxu0
        %v742 = vadd.f32 %v462, %v741
        %v743 = vpop.f32.mrf.mxu0
        %744 = vmatprep.mubr.bf16.mxu0 0
        %745 = vmatmul.mubr.bf16.gmra.mxu0 %v541
        %v746 = vpop.f32.mrf.mxu0
        %v747 = vadd.f32 %v462, %v746
        %v748 = vpop.f32.mrf.mxu0
        %v749 = vpop.f32.mrf.mxu0
        %v750 = vadd.f32 %v462, %v749
        %v751 = vpop.f32.mrf.mxu0
        %752 = vmatprep.mubr.bf16.mxu0 0
        %753 = vmatmul.mubr.bf16.gmra.mxu0 %v542
        %v754 = vpop.f32.mrf.mxu0
        %v755 = vadd.f32 %v462, %v754
        %v756 = vpop.f32.mrf.mxu0
        %v757 = vpop.f32.mrf.mxu0
        %v758 = vadd.f32 %v462, %v757
        %v759 = vpop.f32.mrf.mxu0
        %760 = vmatprep.mubr.bf16.mxu0 0
        %761 = vmatmul.mubr.bf16.gmra.mxu0 %v543
        %v762 = vpop.f32.mrf.mxu0
        %v763 = vadd.f32 %v462, %v762
        %v764 = vpop.f32.mrf.mxu0
        %v765 = vpop.f32.mrf.mxu0
        %v766 = vadd.f32 %v462, %v765
        %v767 = vpop.f32.mrf.mxu0
        %768 = vdwg.mxu0
        %v769 = vmax.f32 %v643, 0.0
        %v770 = vmax.f32 %v646, 0.0
        %v771 = vmax.f32 %v651, 0.0
        %v772 = vmax.f32 %v654, 0.0
        %v773 = vmax.f32 %v659, 0.0
        %v774 = vmax.f32 %v662, 0.0
        %v775 = vmax.f32 %v667, 0.0
        %v776 = vmax.f32 %v670, 0.0
        %v777 = vmax.f32 %v675, 0.0
        %v778 = vmax.f32 %v678, 0.0
        %v779 = vmax.f32 %v683, 0.0
        %v780 = vmax.f32 %v686, 0.0
        %v781 = vmax.f32 %v691, 0.0
        %v782 = vmax.f32 %v694, 0.0
        %v783 = vmax.f32 %v699, 0.0
        %v784 = vmax.f32 %v702, 0.0
        %v785 = vmax.f32 %v707, 0.0
        %v786 = vmax.f32 %v710, 0.0
        %v787 = vmax.f32 %v715, 0.0
        %v788 = vmax.f32 %v718, 0.0
        %v789 = vmax.f32 %v723, 0.0
        %v790 = vmax.f32 %v726, 0.0
        %v791 = vmax.f32 %v731, 0.0
        %v792 = vmax.f32 %v734, 0.0
        %v793 = vmax.f32 %v739, 0.0
        %v794 = vmax.f32 %v742, 0.0
        %v795 = vmax.f32 %v747, 0.0
        %v796 = vmax.f32 %v750, 0.0
        %v797 = vmax.f32 %v755, 0.0
        %v798 = vmax.f32 %v758, 0.0
        %v799 = vmax.f32 %v763, 0.0
        %v800 = vmax.f32 %v766, 0.0
        %v801 = vld [vmem:[#allocation2] sm:$0x3]
        %v802 = vadd.f32 %v769, %v770
        %v803 = vadd.f32 %v802, %v771
        %v804 = vadd.f32 %v803, %v772
        %v805 = vadd.f32 %v804, %v773
        %v806 = vadd.f32 %v805, %v774
        %v807 = vadd.f32 %v806, %v775
        %v808 = vadd.f32 %v807, %v776
        %v809 = vadd.f32 %v808, %v777
        %v810 = vadd.f32 %v809, %v778
        %v811 = vadd.f32 %v810, %v779
        %v812 = vadd.f32 %v811, %v780
        %v813 = vadd.f32 %v812, %v781
        %v814 = vadd.f32 %v813, %v782
        %v815 = vadd.f32 %v814, %v783
        %v816 = vadd.f32 %v815, %v784
        %v817 = vrot.slane %v816, 4
        %v818 = vadd.f32 %v816, %v817
        %v819 = vrot.slane %v818, 2
        %v820 = vadd.f32 %v818, %v819
        %v821 = vrot.slane %v820, 1
        %v822 = vadd.f32 %v820, %v821
        %v823 = vadd.f32 %v785, %v786
        %v824 = vadd.f32 %v823, %v787
        %v825 = vadd.f32 %v824, %v788
        %v826 = vadd.f32 %v825, %v789
        %v827 = vadd.f32 %v826, %v790
        %v828 = vadd.f32 %v827, %v791
        %v829 = vadd.f32 %v828, %v792
        %v830 = vadd.f32 %v829, %v793
        %v831 = vadd.f32 %v830, %v794
        %v832 = vadd.f32 %v831, %v795
        %v833 = vadd.f32 %v832, %v796
        %v834 = vadd.f32 %v833, %v797
        %v835 = vadd.f32 %v834, %v798
        %v836 = vadd.f32 %v835, %v799
        %v837 = vadd.f32 %v836, %v800
        %v838 = vrot.slane %v837, 4
        %v839 = vadd.f32 %v837, %v838
        %v840 = vrot.slane %v839, 2
        %v841 = vadd.f32 %v839, %v840
        %v842 = vrot.slane %v841, 1
        %v843 = vadd.f32 %v841, %v842
        %vm846 = vcmask 1041409
        %v847 = vsel %vm846, %v843, %v822
        %v849 = vadd.f32 %v801, %v847
        %850 = vst [vmem:[#allocation2] sm:$0x3] %v849
        %p851 = scmp.eq.s32.totalorder %s22, 1
        // Predicated region
        $region86: #{dual_encoder_forward.2} parent=76 // pred_check
          %p852 = pneg %p851
        $region87: #{dual_encoder_forward.2} parent=76 // pred_check_branch
          %854 = sbr.rel (%p852) target = $region89
        $region88: #{dual_encoder_forward.2} parent=76 // pred_region
          %v855 = vld [vmem:[#allocation2] sm:$0x3]
          %v856 = vmul.f32 %v855, 0.00390625
          %v857 = vpack.c.bf16 %v856, %v856
          %v858 = vld [vmem:[%s3] sm:$0xf]
          %v859 = vld [vmem:[%s3 + $0x4] sm:$0xf]
          %v860 = vld [vmem:[%s3 + $0x8] sm:$0xf]
          %v861 = vld [vmem:[%s3 + $0xc] sm:$0xf]
          %v862 = vld [vmem:[%s3 + $0x10] sm:$0xf]
          %v863 = vld [vmem:[%s3 + $0x14] sm:$0xf]
          %v864 = vld [vmem:[%s3 + $0x18] sm:$0xf]
          %v865 = vld [vmem:[%s3 + $0x1c] sm:$0xf]
          %v866 = vld [vmem:[%s3 + $0x20] sm:$0xf]
          %v867 = vld [vmem:[%s3 + $0x24] sm:$0xf]
          %v868 = vld [vmem:[%s3 + $0x28] sm:$0xf]
          %v869 = vld [vmem:[%s3 + $0x2c] sm:$0xf]
          %v870 = vld [vmem:[%s3 + $0x30] sm:$0xf]
          %v871 = vld [vmem:[%s3 + $0x34] sm:$0xf]
          %v872 = vld [vmem:[%s3 + $0x38] sm:$0xf]
          %v873 = vld [vmem:[%s3 + $0x3c] sm:$0xf]
          %v874 = vld [vmem:[%s4] sm:$0x1]
          %v876 = vlaneseq
          %v877 = vshrl.u32 %v876, 7
          %v878 = vsub.s32 0, %v877
          %v879 = vrot.slane %v874, %v878
          %v897 = vunpack.c.l.b16 %v858
          %v898 = vunpack.c.l.b16 %v859
          %v899 = vunpack.c.l.b16 %v860
          %v900 = vunpack.c.l.b16 %v861
          %v901 = vunpack.c.l.b16 %v862
          %v902 = vunpack.c.l.b16 %v863
          %v903 = vunpack.c.l.b16 %v864
          %v904 = vunpack.c.l.b16 %v865
          %v905 = vunpack.c.l.b16 %v866
          %v906 = vunpack.c.l.b16 %v867
          %v907 = vunpack.c.l.b16 %v868
          %v908 = vunpack.c.l.b16 %v869
          %v909 = vunpack.c.l.b16 %v870
          %v910 = vunpack.c.l.b16 %v871
          %v911 = vunpack.c.l.b16 %v872
          %v912 = vunpack.c.l.b16 %v873
          %v913 = vpack.c.b16 %v898, %v897
          %v914 = vpack.c.b16 %v900, %v899
          %v915 = vpack.c.b16 %v902, %v901
          %v916 = vpack.c.b16 %v904, %v903
          %v917 = vpack.c.b16 %v906, %v905
          %v918 = vpack.c.b16 %v908, %v907
          %v919 = vpack.c.b16 %v910, %v909
          %v920 = vpack.c.b16 %v912, %v911
          %929 = vmatprep.subr.bf16.mxu0 0
          %930 = vmatpush1.bf16.msra.mxu0 %v920
          %931 = vmatprep.subr.bf16.mxu0 0
          %932 = vmatpush1.bf16.msra.mxu0 %v919
          %933 = vmatprep.subr.bf16.mxu0 0
          %934 = vmatpush1.bf16.msra.mxu0 %v918
          %935 = vmatprep.subr.bf16.mxu0 0
          %936 = vmatpush1.bf16.msra.mxu0 %v917
          %937 = vmatprep.subr.bf16.mxu0 0
          %938 = vmatpush1.bf16.msra.mxu0 %v916
          %939 = vmatprep.subr.bf16.mxu0 0
          %940 = vmatpush1.bf16.msra.mxu0 %v915
          %941 = vmatprep.subr.bf16.mxu0 0
          %942 = vmatpush1.bf16.msra.mxu0 %v914
          %943 = vmatprep.subr.bf16.mxu0 0
          %944 = vmatpush1.bf16.msra.mxu0 %v913
          %945 = vmatprep.subr.bf16.mxu0 0
          %946 = vmatpush2.bf16.msra.mxu0 0
          %947 = vmatprep.subr.bf16.mxu0 0
          %948 = vmatpush2.bf16.msra.mxu0 0
          %949 = vmatprep.subr.bf16.mxu0 0
          %950 = vmatpush2.bf16.msra.mxu0 0
          %951 = vmatprep.subr.bf16.mxu0 0
          %952 = vmatpush2.bf16.msra.mxu0 0
          %953 = vmatprep.subr.bf16.mxu0 0
          %954 = vmatpush2.bf16.msra.mxu0 0
          %955 = vmatprep.subr.bf16.mxu0 0
          %956 = vmatpush2.bf16.msra.mxu0 0
          %957 = vmatprep.subr.bf16.mxu0 0
          %958 = vmatpush2.bf16.msra.mxu0 0
          %959 = vmatprep.subr.bf16.mxu0 0
          %960 = vmatpush2.bf16.msra.mxu0 0
          %961 = vmatprep.mubr.bf16.mxu0 0
          %962 = vmatmul.mubr.bf16.gmra.mxu0 %v857
          %v963 = vpop.f32.mrf.mxu0
          %v964 = vadd.f32 %v879, %v963
          %v965 = vpop.f32.mrf.mxu0
          %v966 = vpop.f32.mrf.mxu0
          %v967 = vpop.f32.mrf.mxu0
          %968 = vdwg.mxu0
          %v969 = vmul.f32 %v964, %v964
          %vm970 = vcmask 1041408
          %v971 = vsel %vm970, %v969, 0.0
          %972 = vadd.xlane.f32.xlu0 %v971
          %v973 = vpop.xlane.xlu0 %972
          %v974 = vmax.f32 %v973, 1e-24
          %v975 = vrsqrt.pop %v974
          %v976 = vmul.f32 %v964, %v975
          %977 = vst [vmem:[#allocation4] sm:$0x3] %v976
        $region89: #{dual_encoder_forward.2} parent=76 // pred_fallthru
          _
        // Predicated region
        $region90: #{dual_encoder_forward.2} parent=76 // pred_check
          %p978 = pneg %p159
        $region91: #{dual_encoder_forward.2} parent=76 // pred_check_branch
          %980 = sbr.rel (%p978) target = $region93
        $region92: #{dual_encoder_forward.2} parent=76 // pred_region
          %s982 = ssub.s32 32, 32
          %983 = vsyncadd [#allocation5], %s982
          %s984 = smul.addr %s21, 32
          %s985 = scalar_lea.hbm %s5, %s984
          %s987 = sshll.u32 [#allocation4], 4
          %s988 = int_to_ptr.vmem [resolvable:$true] %s987
          %990 = dma.vmem_to_hbm [thread:$0]  %s988, 32, %s985, [#allocation5]
        $region93: #{dual_encoder_forward.2} parent=76 // pred_fallthru
          _
        // Predicated region
        $region94: #{dual_encoder_forward.2} parent=76 // pred_check
          %p991 = pneg %p159
        $region95: #{dual_encoder_forward.2} parent=76 // pred_check_branch
          %993 = sbr.rel (%p991) target = $region97
        $region96: #{dual_encoder_forward.2} parent=76 // pred_region
          %994 = dma.done [#allocation5], 32
        $region97: #{dual_encoder_forward.2} parent=76 // pred_fallthru
          _
      $region77: #{dual_encoder_forward.2} parent=5 // pred_fallthru
        _
      %p995 = scmp.le.s32.totalorder 2, %s12
      // Predicated region
      $region98: #{dual_encoder_forward.2} parent=5 // pred_check
        %p996 = pneg %p995
      $region99: #{dual_encoder_forward.2} parent=5 // pred_check_branch
        %998 = sbr.rel (%p996) target = $region101
      $region100: #{dual_encoder_forward.2} parent=5 // pred_region
        %s999 = ssub.s32 %s12, 2
      $region101: #{dual_encoder_forward.2} parent=5 // pred_fallthru
        _
    $region6: #{dual_encoder_forward.2} parent=1 // loop_footer
      %s16 = sadd.s32 1, %s12
    $region7: #{dual_encoder_forward.2} parent=1 // loop_footer_branch
      %11 = sbr.rel target = $region3
    $region8: #{dual_encoder_forward.2} parent=1 // loop_exit
      _
    %1000 = vsyncpa [#allocation5], 1
    %s1001 = scalar_lea.sflag [#allocation5], 1
    %1002 = vsyncpa %s1001, 1

</llo_original>
